<compile_context>
chip_gen: v7x
topology: tpu7x:2x2x1
jax: 0.10.0
libtpu: 0.0.40
codegen_flags: <defaults>
</compile_context>

<pallas_src>
import numpy as np
import jax
import jax.numpy as jnp
from jax.experimental import pallas as pl
from jax.experimental.pallas import tpu as pltpu


# ----------------------------------------------------------------------------
# Host-side init: LDN continuous (A, B) + ZOH discretization (expm via block trick)
# ----------------------------------------------------------------------------
def _expm(M):
    """Matrix exponential via scaling-and-squaring + Taylor (float64, small matrices)."""
    n = M.shape[0]
    nrm = np.linalg.norm(M, 1)
    s = max(0, int(np.ceil(np.log2(max(nrm, 1.0)))) + 1)
    A = M / (2.0 ** s)
    E = np.eye(n)
    term = np.eye(n)
    for k in range(1, 25):
        term = term @ A / k
        E = E + term
    for _ in range(s):
        E = E @ E
    return E


def ldn_zoh(order, theta, dt=1.0):
    """Legendre Delay Network state-space, discretized with zero-order hold."""
    Q = np.arange(order, dtype=np.float64)
    R = (2.0 * Q + 1.0)[:, None] / theta
    i, j = np.meshgrid(Q, Q, indexing="ij")
    A = np.where(i < j, -1.0, (-1.0) ** (i - j + 1.0)) * R          # (N, N)
    B = ((-1.0) ** Q)[:, None] * R                                   # (N, 1)
    M = np.zeros((order + 1, order + 1), dtype=np.float64)
    M[:order, :order] = A * dt
    M[:order, order:] = B * dt
    E = _expm(M)
    Ad = E[:order, :order]
    Bd = E[:order, order:order + 1]
    return Ad, Bd


def init_params(key, units, order, theta, in_features=1, n_classes=10):
    """Deterministic parameter init matching the PyTorch module's __init__."""
    H, N = units, order
    kmem, kw, kb = jax.random.split(key, 3)
    params = {}
    params["ex"] = jnp.ones((1, in_features), jnp.float32)           # input_encoders  = 1
    params["eh"] = jnp.zeros((1, H), jnp.float32)                    # hidden_encoders = 0
    params["em"] = jnp.zeros((1, N), jnp.float32)                    # memory_encoders = 0
    params["wx"] = jnp.zeros((H, in_features), jnp.float32)          # input_kernel    = 0
    params["wh"] = jnp.zeros((H, H), jnp.float32)                    # hidden_kernel   = 0
    std = float(np.sqrt(2.0 / (H + N)))                              # xavier_normal_
    params["wm"] = std * jax.random.normal(kmem, (H, N), jnp.float32)
    Ad, Bd = ldn_zoh(N, theta)
    params["at"] = jnp.asarray(Ad - np.eye(N), jnp.float32)          # AT = Ad - I  (N, N)
    params["bt"] = jnp.asarray(Bd, jnp.float32)                      # BT = Bd      (N, 1)
    bound = 1.0 / float(np.sqrt(H))                                  # nn.Linear default init
    params["wd"] = jax.random.uniform(kw, (n_classes, H), jnp.float32, -bound, bound)
    params["bd"] = jax.random.uniform(kb, (n_classes,), jnp.float32, -bound, bound)
    return params


# ----------------------------------------------------------------------------
# Shape helpers
# ----------------------------------------------------------------------------
def _rup(x, m):
    return ((x + m - 1) // m) * m


def _pick_time_chunk(T, max_chunk=128):
    """Largest divisor of T <= max_chunk, preferring multiples of 8.

    TC is capped at 128 so the per-step compare/select used for the x-column
    extraction never exceeds one vreg row-group per 8 sublanes; per-grid-step
    overhead (~0.35 us) times nc is negligible at these sizes.
    """
    divs = [d for d in range(1, min(T, max_chunk) + 1) if T % d == 0]
    mult8 = [d for d in divs if d % 8 == 0]
    return max(mult8) if mult8 else max(divs)


def _pick_batch_block(BP, max_blk=256, min_blocks=1):
    """Largest multiple-of-8 divisor of the padded batch <= max_blk.

    min_blocks>=2 keeps the 'parallel' batch axis split so v7x's two
    TensorCores both get work; on v5e/v6e leave it at 1 (largest tile wins).
    """
    divs = [d for d in range(8, min(BP, max_blk) + 1, 8)
            if BP % d == 0 and BP // d >= min_blocks]
    if not divs:
        divs = [d for d in range(8, min(BP, max_blk) + 1, 8) if BP % d == 0]
    return max(divs) if divs else BP


# ----------------------------------------------------------------------------
# Pallas forward: grid = (batch blocks [parallel], time chunks [arbitrary])
# ----------------------------------------------------------------------------
def lmu_forward(inputs, params, *, weights_dtype=jnp.float32,
                max_time_chunk=128, max_batch_block=256, min_batch_blocks=1):
    """inputs: (batch, seq, 1) float32 (same axis convention as the PyTorch module).

    weights_dtype: jnp.float32 (default, exact vs. reference) or jnp.bfloat16
    (v6e/v7x MXU lever; accumulation/carries/epilogue stay f32).
    """
    B, T, F = inputs.shape
    assert F == 1, "module fixes input_size=1"
    H = params["wh"].shape[0]
    N = params["at"].shape[0]
    C = params["wd"].shape[0]

    HP, NP, CP = _rup(H, 128), _rup(N, 128), _rup(C, 128)
    BP = _rup(B, 8)
    Bblk = _pick_batch_block(BP, max_blk=max_batch_block, min_blocks=min_batch_blocks)
    nb = BP // Bblk
    TC = _pick_time_chunk(T, max_chunk=max_time_chunk)
    nc = T // TC
    UNROLL = min(TC, 8)
    f32 = jnp.float32
    wdt = weights_dtype

    # ---- fold encoders / Bd into the memory update, pack recurrent kernels ----
    # m_delta = m @ [(Ad-I)^T + Em^T Bd^T] + h @ [Eh^T Bd^T] + x_t * [Ex^T Bd^T]
    # h_new   = tanh(h @ Wh^T + m @ Wm^T + m_delta @ Wm^T + x_t * Wx^T)
    btT = params["bt"].T.astype(f32)                                  # (1, N) = Bd^T
    ExM = params["ex"].T @ btT                                        # (1, N) = Ex^T Bd^T
    EhM = params["eh"].T @ btT                                        # (H, N) = Eh^T Bd^T
    AtM = params["at"].T + params["em"].T @ btT                       # (N, N)

    # x -> [h-pre | m-delta] injection: single packed row (one broadcast-mul/step)
    xpack = (jnp.zeros((1, HP + NP), f32)
             .at[:, :H].set(params["wx"].T)
             .at[:, HP:HP + N].set(ExM))
    # h -> [h-pre | m-delta]
    wH = (jnp.zeros((HP, HP + NP), f32)
          .at[:H, :H].set(params["wh"].T)
          .at[:H, HP:HP + N].set(EhM)).astype(wdt)
    # m -> [h-pre | m-delta]
    wM = (jnp.zeros((NP, HP + NP), f32)
          .at[:N, :H].set(params["wm"].T)
          .at[:N, HP:HP + N].set(AtM)).astype(wdt)
    # m_delta -> h-pre (the only dot left on the serial critical path)
    wmT = (jnp.zeros((NP, HP), f32).at[:N, :H].set(params["wm"].T)).astype(wdt)
    wdT = (jnp.zeros((HP, CP), f32).at[:H, :C].set(params["wd"].T)).astype(wdt)
    bd = jnp.zeros((1, CP), f32).at[:, :C].set(params["bd"][None, :])

    # ---- x: (B, T, 1) -> (nb, nc, Bblk, TC): lane-dense, contiguous DMA per chunk ----
    x = inputs.reshape(B, T).astype(f32)
    x = jnp.pad(x, ((0, BP - B), (0, 0)))
    x = x.reshape(nb, Bblk, nc, TC).transpose(0, 2, 1, 3)             # (nb, nc, Bblk, TC)

    def kernel(x_ref, xpack_ref, wH_ref, wM_ref, wmT_ref, wdT_ref, bd_ref,
               out_ref, h_sc, m_sc):
        c = pl.program_id(1)

        # Relies on grid iteration order: batch axis outer (per-core scratch
        # under "parallel"), time axis inner -> c==0 is the first chunk of
        # every batch block on every core.
        @pl.when(c == 0)
        def _init():
            h_sc[...] = jnp.zeros_like(h_sc)
            m_sc[...] = jnp.zeros_like(m_sc)

        xpack_v = xpack_ref[...]        # (1, HP+NP) f32
        wH_v = wH_ref[...]              # (HP, HP+NP)
        wM_v = wM_ref[...]              # (NP, HP+NP)
        wmT_v = wmT_ref[...]            # (NP, HP)
        cdt = wH_v.dtype

        x_all = x_ref[...]              # (Bblk, TC) f32, time on lanes
        lane_iota = jax.lax.broadcasted_iota(jnp.int32, (Bblk, TC), 1)  # hoisted

        def step(tt, carry):
            h, m = carry                                             # f32 carries
            # x_t column extraction: compare + lane-reduce (VPU/XLU), independent
            # of h/m so it overlaps with the MXU latency below.
            x_col = jnp.sum(jnp.where(lane_iota == tt, x_all, 0.0),
                            axis=1, keepdims=True)                   # (Bblk, 1)
            xc = x_col * xpack_v                                      # (Bblk, HP+NP)
            # Shared MXU stage: both recurrent products at once, f32 accumulation.
            p = (jnp.dot(h.astype(cdt), wH_v, preferred_element_type=jnp.float32)
                 + jnp.dot(m.astype(cdt), wM_v, preferred_element_type=jnp.float32))
            s0 = p[:, :HP]                                            # h@Wh^T + m@Wm^T
            d0 = p[:, HP:]                                            # h@EhM  + m@AtM
            m_delta = d0 + xc[:, HP:]
            m_new = m + m_delta
            h_new = jnp.tanh(
                s0 + xc[:, :HP]
                + jnp.dot(m_delta.astype(cdt), wmT_v,
                          preferred_element_type=jnp.float32))
            return h_new, m_new

        h, m = jax.lax.fori_loop(0, TC, step, (h_sc[...], m_sc[...]),
                                 unroll=UNROLL)
        h_sc[...] = h
        m_sc[...] = m

        # Output block index is constant over the time axis, so it stays resident
        # in VMEM; we only materialize the classifier on the final chunk.
        # Epilogue stays f32 (masking with -1e30 is only safe in f32).
        @pl.when(c == pl.num_programs(1) - 1)
        def _finish():
            logits = jnp.dot(h.astype(wdT_ref.dtype), wdT_ref[...],
                             preferred_element_type=jnp.float32) + bd_ref[...]
            col = jax.lax.broadcasted_iota(jnp.int32, logits.shape, 1)
            logits = jnp.where(col < C, logits, jnp.float32(-1e30))  # mask padded classes
            z = logits - jnp.max(logits, axis=1, keepdims=True)
            e = jnp.exp(z)
            out_ref[...] = e / jnp.sum(e, axis=1, keepdims=True)

    grid_spec = pltpu.PrefetchScalarGridSpec(
        num_scalar_prefetch=0,
        grid=(nb, nc),
        in_specs=[
            pl.BlockSpec((None, None, Bblk, TC), lambda b, c: (b, c, 0, 0)),
            pl.BlockSpec((1, HP + NP), lambda b, c: (0, 0)),
            pl.BlockSpec((HP, HP + NP), lambda b, c: (0, 0)),
            pl.BlockSpec((NP, HP + NP), lambda b, c: (0, 0)),
            pl.BlockSpec((NP, HP), lambda b, c: (0, 0)),
            pl.BlockSpec((HP, CP), lambda b, c: (0, 0)),
            pl.BlockSpec((1, CP), lambda b, c: (0, 0)),
        ],
        out_specs=pl.BlockSpec((Bblk, CP), lambda b, c: (b, 0)),
        scratch_shapes=[pltpu.VMEM((Bblk, HP), jnp.float32),   # h carry (f32 always)
                        pltpu.VMEM((Bblk, NP), jnp.float32)],  # m carry (f32 always)
    )

    out = pl.pallas_call(
        kernel,
        out_shape=jax.ShapeDtypeStruct((BP, CP), jnp.float32),
        grid_spec=grid_spec,
        compiler_params=pltpu.CompilerParams(
            dimension_semantics=("parallel", "arbitrary"),
            vmem_limit_bytes=32 * 1024 * 1024),
    )(x, xpack, wH, wM, wmT, wdT, bd)

    return out[:B, :C]


# ----------------------------------------------------------------------------
# Pure-JAX reference (mirrors the PyTorch forward exactly) for a correctness check
# ----------------------------------------------------------------------------
def lmu_reference(inputs, params):
    B, T, _ = inputs.shape
    H = params["wh"].shape[0]
    N = params["at"].shape[0]
    hp = lambda a, b: jnp.dot(a, b, precision=jax.lax.Precision.HIGHEST)
    h = jnp.zeros((B, H), jnp.float32)
    m = jnp.zeros((B, N), jnp.float32)
    for t in range(T):
        x_t = inputs[:, t, :]
        u = hp(x_t, params["ex"].T) + hp(h, params["eh"].T) + hp(m, params["em"].T)
        m = m + hp(m, params["at"].T) + hp(u, params["bt"].T)
        h = jnp.tanh(hp(x_t, params["wx"].T) + hp(h, params["wh"].T)
                     + hp(m, params["wm"].T))
    logits = hp(h, params["wd"].T) + params["bd"][None, :]
    return jax.nn.softmax(logits, axis=1)


if __name__ == "__main__":
    # Small shapes consistent with the module (input_size=1, seq of scalar pixels).
    B, T = 2, 8
    UNITS, ORDER = 32, 32
    # TODO(synk): the reference LMU wrapper stores theta=28**2 but never forwards it
    # to LMUCell, so the cell's default (theta=100) is what actually runs; we use 100.
    THETA = 100.0

    key = jax.random.PRNGKey(0)
    kp, kx = jax.random.split(key)
    params = init_params(kp, UNITS, ORDER, THETA)
    x = jax.random.normal(kx, (B, T, 1), jnp.float32)

    # f32 weights here so the check against the HIGHEST-precision reference is tight;
    # pass weights_dtype=jnp.bfloat16 on v6e/v7x for the MXU-bandwidth lever.
    out = jax.block_until_ready(jax.jit(lmu_forward)(x, params))
    ref = jax.block_until_ready(lmu_reference(x, params))

    assert out.shape == (B, 10)
    np.testing.assert_allclose(np.asarray(out), np.asarray(ref), rtol=2e-3, atol=2e-3)
    print("KERNEL_OK")
</pallas_src>

<mosaic_0001>
module attributes {stable_mosaic.version = 11 : i64} {
  func.func @kernel(%arg0: i32, %arg1: i32, %arg2: memref<1x1x8x8xf32, #tpu.memory_space<vmem>>, %arg3: memref<1x256xf32, #tpu.memory_space<vmem>>, %arg4: memref<128x256xf32, #tpu.memory_space<vmem>>, %arg5: memref<128x256xf32, #tpu.memory_space<vmem>>, %arg6: memref<128x128xf32, #tpu.memory_space<vmem>>, %arg7: memref<128x128xf32, #tpu.memory_space<vmem>>, %arg8: memref<1x128xf32, #tpu.memory_space<vmem>>, %arg9: memref<8x128xf32, #tpu.memory_space<vmem>>, %arg10: memref<8x128xf32, #tpu.memory_space<vmem>>, %arg11: memref<8x128xf32, #tpu.memory_space<vmem>>) attributes {dimension_semantics = [#tpu.dimension_semantics<parallel>, #tpu.dimension_semantics<arbitrary>], iteration_bounds = array<i64: 1, 1>, scalar_prefetch = 0 : i64, scratch_operands = 2 : i64, tpu.core_type = #tpu.core_type<tc>, window_params = [{transform_indices = @transform_0, window_bounds = array<i64: 1, 1, 8, 8>}, {pipeline_mode = #tpu.pipeline_mode<synchronous>, transform_indices = @transform_1, window_bounds = array<i64: 1, 256>}, {pipeline_mode = #tpu.pipeline_mode<synchronous>, transform_indices = @transform_2, window_bounds = array<i64: 128, 256>}, {pipeline_mode = #tpu.pipeline_mode<synchronous>, transform_indices = @transform_3, window_bounds = array<i64: 128, 256>}, {pipeline_mode = #tpu.pipeline_mode<synchronous>, transform_indices = @transform_4, window_bounds = array<i64: 128, 128>}, {pipeline_mode = #tpu.pipeline_mode<synchronous>, transform_indices = @transform_5, window_bounds = array<i64: 128, 128>}, {pipeline_mode = #tpu.pipeline_mode<synchronous>, transform_indices = @transform_6, window_bounds = array<i64: 1, 128>}, {transform_indices = @transform_7, window_bounds = array<i64: 8, 128>}]} {
    %c0_i32 = arith.constant 0 : i32
    %0 = arith.cmpi eq, %arg1, %c0_i32 : i32
    %1 = arith.extui %0 : i1 to i32
    %c0_i32_0 = arith.constant 0 : i32
    %2 = arith.cmpi ne, %1, %c0_i32_0 : i32
    scf.if %2 {
      %cst_62 = arith.constant 0.000000e+00 : f32
      %193 = vector.broadcast %cst_62 : f32 to vector<8x128xf32>
      %c0_63 = arith.constant 0 : index
      %c0_64 = arith.constant 0 : index
      %194 = vector.load %arg10[%c0_63, %c0_64] : memref<8x128xf32, #tpu.memory_space<vmem>>, vector<8x128xf32>
      tpu.vector_store %arg10[%c0_63, %c0_64], %193 {strides = array<i32>} : memref<8x128xf32, #tpu.memory_space<vmem>>, vector<8x128xf32>,
      %cst_65 = arith.constant 0.000000e+00 : f32
      %195 = vector.broadcast %cst_65 : f32 to vector<8x128xf32>
      %c0_66 = arith.constant 0 : index
      %c0_67 = arith.constant 0 : index
      %196 = vector.load %arg11[%c0_66, %c0_67] : memref<8x128xf32, #tpu.memory_space<vmem>>, vector<8x128xf32>
      tpu.vector_store %arg11[%c0_66, %c0_67], %195 {strides = array<i32>} : memref<8x128xf32, #tpu.memory_space<vmem>>, vector<8x128xf32>,
    } else {
    }
    %c0 = arith.constant 0 : index
    %c0_1 = arith.constant 0 : index
    %3 = vector.load %arg3[%c0, %c0_1] : memref<1x256xf32, #tpu.memory_space<vmem>>, vector<1x256xf32>
    %c0_2 = arith.constant 0 : index
    %c0_3 = arith.constant 0 : index
    %4 = vector.load %arg4[%c0_2, %c0_3] : memref<128x256xf32, #tpu.memory_space<vmem>>, vector<128x256xf32>
    %c0_4 = arith.constant 0 : index
    %c0_5 = arith.constant 0 : index
    %5 = vector.load %arg5[%c0_4, %c0_5] : memref<128x256xf32, #tpu.memory_space<vmem>>, vector<128x256xf32>
    %c0_6 = arith.constant 0 : index
    %c0_7 = arith.constant 0 : index
    %6 = vector.load %arg6[%c0_6, %c0_7] : memref<128x128xf32, #tpu.memory_space<vmem>>, vector<128x128xf32>
    %c0_8 = arith.constant 0 : index
    %c0_9 = arith.constant 0 : index
    %c0_10 = arith.constant 0 : index
    %c0_11 = arith.constant 0 : index
    %7 = vector.load %arg2[%c0_8, %c0_9, %c0_10, %c0_11] : memref<1x1x8x8xf32, #tpu.memory_space<vmem>>, vector<1x1x8x8xf32>
    %8 = vector.shape_cast %7 : vector<1x1x8x8xf32> to vector<8x8xf32>
    %9 = tpu.iota {dimensions = array<i32: 1>} : vector<8x8xi32>
    %c0_12 = arith.constant 0 : index
    %c0_13 = arith.constant 0 : index
    %10 = vector.load %arg10[%c0_12, %c0_13] : memref<8x128xf32, #tpu.memory_space<vmem>>, vector<8x128xf32>
    %c0_14 = arith.constant 0 : index
    %c0_15 = arith.constant 0 : index
    %11 = vector.load %arg11[%c0_14, %c0_15] : memref<8x128xf32, #tpu.memory_space<vmem>>, vector<8x128xf32>
    %c0_i32_16 = arith.constant 0 : i32
    %12 = vector.broadcast %c0_i32_16 : i32 to vector<8x8xi32>
    %13 = arith.cmpi eq, %9, %12 : vector<8x8xi32>
    %cst = arith.constant 0.000000e+00 : f32
    %14 = vector.broadcast %cst : f32 to vector<8x8xf32>
    %15 = arith.select %13, %8, %14 : vector<8x8xi1>, vector<8x8xf32>
    %cst_17 = arith.constant dense<0.000000e+00> : vector<8xf32>
    %16 = vector.multi_reduction <add>, %15, %cst_17 [1] : vector<8x8xf32> to vector<8xf32>
    %17 = vector.shape_cast %16 : vector<8xf32> to vector<8x1xf32>
    %18 = vector.broadcast %17 : vector<8x1xf32> to vector<8x256xf32>
    %19 = vector.broadcast %3 : vector<1x256xf32> to vector<8x256xf32>
    %20 = arith.mulf %18, %19 : vector<8x256xf32>
    %cst_18 = arith.constant dense<0.000000e+00> : vector<8x256xf32>
    %21 = tpu.matmul %10, %4, %cst_18 {dimension_numbers = #tpu.dot_dimension_numbers<[1], [0], [0], [1], [0, 0, 1, 1], [], []>} : vector<8x128xf32>, vector<128x256xf32>, vector<8x256xf32> -> vector<8x256xf32>
    %cst_19 = arith.constant dense<0.000000e+00> : vector<8x256xf32>
    %22 = tpu.matmul %11, %5, %cst_19 {dimension_numbers = #tpu.dot_dimension_numbers<[1], [0], [0], [1], [0, 0, 1, 1], [], []>} : vector<8x128xf32>, vector<128x256xf32>, vector<8x256xf32> -> vector<8x256xf32>
    %23 = arith.addf %21, %22 : vector<8x256xf32>
    %24 = vector.extract_strided_slice %23 {offsets = [0, 0], sizes = [8, 128], strides = [1, 1]} : vector<8x256xf32> to vector<8x128xf32>
    %25 = vector.extract_strided_slice %23 {offsets = [0, 128], sizes = [8, 128], strides = [1, 1]} : vector<8x256xf32> to vector<8x128xf32>
    %26 = vector.extract_strided_slice %20 {offsets = [0, 128], sizes = [8, 128], strides = [1, 1]} : vector<8x256xf32> to vector<8x128xf32>
    %27 = arith.addf %25, %26 : vector<8x128xf32>
    %28 = arith.addf %11, %27 : vector<8x128xf32>
    %29 = vector.extract_strided_slice %20 {offsets = [0, 0], sizes = [8, 128], strides = [1, 1]} : vector<8x256xf32> to vector<8x128xf32>
    %30 = arith.addf %24, %29 : vector<8x128xf32>
    %cst_20 = arith.constant dense<0.000000e+00> : vector<8x128xf32>
    %31 = tpu.matmul %27, %6, %cst_20 {dimension_numbers = #tpu.dot_dimension_numbers<[1], [0], [0], [1], [0, 0, 1, 1], [], []>} : vector<8x128xf32>, vector<128x128xf32>, vector<8x128xf32> -> vector<8x128xf32>
    %32 = arith.addf %30, %31 : vector<8x128xf32>
    %33 = math.tanh %32 : vector<8x128xf32>
    %c1_i32 = arith.constant 1 : i32
    %34 = vector.broadcast %c1_i32 : i32 to vector<8x8xi32>
    %35 = arith.cmpi eq, %9, %34 : vector<8x8xi32>
    %cst_21 = arith.constant 0.000000e+00 : f32
    %36 = vector.broadcast %cst_21 : f32 to vector<8x8xf32>
    %37 = arith.select %35, %8, %36 : vector<8x8xi1>, vector<8x8xf32>
    %cst_22 = arith.constant dense<0.000000e+00> : vector<8xf32>
    %38 = vector.multi_reduction <add>, %37, %cst_22 [1] : vector<8x8xf32> to vector<8xf32>
    %39 = vector.shape_cast %38 : vector<8xf32> to vector<8x1xf32>
    %40 = vector.broadcast %39 : vector<8x1xf32> to vector<8x256xf32>
    %41 = vector.broadcast %3 : vector<1x256xf32> to vector<8x256xf32>
    %42 = arith.mulf %40, %41 : vector<8x256xf32>
    %cst_23 = arith.constant dense<0.000000e+00> : vector<8x256xf32>
    %43 = tpu.matmul %33, %4, %cst_23 {dimension_numbers = #tpu.dot_dimension_numbers<[1], [0], [0], [1], [0, 0, 1, 1], [], []>} : vector<8x128xf32>, vector<128x256xf32>, vector<8x256xf32> -> vector<8x256xf32>
    %cst_24 = arith.constant dense<0.000000e+00> : vector<8x256xf32>
    %44 = tpu.matmul %28, %5, %cst_24 {dimension_numbers = #tpu.dot_dimension_numbers<[1], [0], [0], [1], [0, 0, 1, 1], [], []>} : vector<8x128xf32>, vector<128x256xf32>, vector<8x256xf32> -> vector<8x256xf32>
    %45 = arith.addf %43, %44 : vector<8x256xf32>
    %46 = vector.extract_strided_slice %45 {offsets = [0, 0], sizes = [8, 128], strides = [1, 1]} : vector<8x256xf32> to vector<8x128xf32>
    %47 = vector.extract_strided_slice %45 {offsets = [0, 128], sizes = [8, 128], strides = [1, 1]} : vector<8x256xf32> to vector<8x128xf32>
    %48 = vector.extract_strided_slice %42 {offsets = [0, 128], sizes = [8, 128], strides = [1, 1]} : vector<8x256xf32> to vector<8x128xf32>
    %49 = arith.addf %47, %48 : vector<8x128xf32>
    %50 = arith.addf %28, %49 : vector<8x128xf32>
    %51 = vector.extract_strided_slice %42 {offsets = [0, 0], sizes = [8, 128], strides = [1, 1]} : vector<8x256xf32> to vector<8x128xf32>
    %52 = arith.addf %46, %51 : vector<8x128xf32>
    %cst_25 = arith.constant dense<0.000000e+00> : vector<8x128xf32>
    %53 = tpu.matmul %49, %6, %cst_25 {dimension_numbers = #tpu.dot_dimension_numbers<[1], [0], [0], [1], [0, 0, 1, 1], [], []>} : vector<8x128xf32>, vector<128x128xf32>, vector<8x128xf32> -> vector<8x128xf32>
    %54 = arith.addf %52, %53 : vector<8x128xf32>
    %55 = math.tanh %54 : vector<8x128xf32>
    %c2_i32 = arith.constant 2 : i32
    %56 = vector.broadcast %c2_i32 : i32 to vector<8x8xi32>
    %57 = arith.cmpi eq, %9, %56 : vector<8x8xi32>
    %cst_26 = arith.constant 0.000000e+00 : f32
    %58 = vector.broadcast %cst_26 : f32 to vector<8x8xf32>
    %59 = arith.select %57, %8, %58 : vector<8x8xi1>, vector<8x8xf32>
    %cst_27 = arith.constant dense<0.000000e+00> : vector<8xf32>
    %60 = vector.multi_reduction <add>, %59, %cst_27 [1] : vector<8x8xf32> to vector<8xf32>
    %61 = vector.shape_cast %60 : vector<8xf32> to vector<8x1xf32>
    %62 = vector.broadcast %61 : vector<8x1xf32> to vector<8x256xf32>
    %63 = vector.broadcast %3 : vector<1x256xf32> to vector<8x256xf32>
    %64 = arith.mulf %62, %63 : vector<8x256xf32>
    %cst_28 = arith.constant dense<0.000000e+00> : vector<8x256xf32>
    %65 = tpu.matmul %55, %4, %cst_28 {dimension_numbers = #tpu.dot_dimension_numbers<[1], [0], [0], [1], [0, 0, 1, 1], [], []>} : vector<8x128xf32>, vector<128x256xf32>, vector<8x256xf32> -> vector<8x256xf32>
    %cst_29 = arith.constant dense<0.000000e+00> : vector<8x256xf32>
    %66 = tpu.matmul %50, %5, %cst_29 {dimension_numbers = #tpu.dot_dimension_numbers<[1], [0], [0], [1], [0, 0, 1, 1], [], []>} : vector<8x128xf32>, vector<128x256xf32>, vector<8x256xf32> -> vector<8x256xf32>
    %67 = arith.addf %65, %66 : vector<8x256xf32>
    %68 = vector.extract_strided_slice %67 {offsets = [0, 0], sizes = [8, 128], strides = [1, 1]} : vector<8x256xf32> to vector<8x128xf32>
    %69 = vector.extract_strided_slice %67 {offsets = [0, 128], sizes = [8, 128], strides = [1, 1]} : vector<8x256xf32> to vector<8x128xf32>
    %70 = vector.extract_strided_slice %64 {offsets = [0, 128], sizes = [8, 128], strides = [1, 1]} : vector<8x256xf32> to vector<8x128xf32>
    %71 = arith.addf %69, %70 : vector<8x128xf32>
    %72 = arith.addf %50, %71 : vector<8x128xf32>
    %73 = vector.extract_strided_slice %64 {offsets = [0, 0], sizes = [8, 128], strides = [1, 1]} : vector<8x256xf32> to vector<8x128xf32>
    %74 = arith.addf %68, %73 : vector<8x128xf32>
    %cst_30 = arith.constant dense<0.000000e+00> : vector<8x128xf32>
    %75 = tpu.matmul %71, %6, %cst_30 {dimension_numbers = #tpu.dot_dimension_numbers<[1], [0], [0], [1], [0, 0, 1, 1], [], []>} : vector<8x128xf32>, vector<128x128xf32>, vector<8x128xf32> -> vector<8x128xf32>
    %76 = arith.addf %74, %75 : vector<8x128xf32>
    %77 = math.tanh %76 : vector<8x128xf32>
    %c3_i32 = arith.constant 3 : i32
    %78 = vector.broadcast %c3_i32 : i32 to vector<8x8xi32>
    %79 = arith.cmpi eq, %9, %78 : vector<8x8xi32>
    %cst_31 = arith.constant 0.000000e+00 : f32
    %80 = vector.broadcast %cst_31 : f32 to vector<8x8xf32>
    %81 = arith.select %79, %8, %80 : vector<8x8xi1>, vector<8x8xf32>
    %cst_32 = arith.constant dense<0.000000e+00> : vector<8xf32>
    %82 = vector.multi_reduction <add>, %81, %cst_32 [1] : vector<8x8xf32> to vector<8xf32>
    %83 = vector.shape_cast %82 : vector<8xf32> to vector<8x1xf32>
    %84 = vector.broadcast %83 : vector<8x1xf32> to vector<8x256xf32>
    %85 = vector.broadcast %3 : vector<1x256xf32> to vector<8x256xf32>
    %86 = arith.mulf %84, %85 : vector<8x256xf32>
    %cst_33 = arith.constant dense<0.000000e+00> : vector<8x256xf32>
    %87 = tpu.matmul %77, %4, %cst_33 {dimension_numbers = #tpu.dot_dimension_numbers<[1], [0], [0], [1], [0, 0, 1, 1], [], []>} : vector<8x128xf32>, vector<128x256xf32>, vector<8x256xf32> -> vector<8x256xf32>
    %cst_34 = arith.constant dense<0.000000e+00> : vector<8x256xf32>
    %88 = tpu.matmul %72, %5, %cst_34 {dimension_numbers = #tpu.dot_dimension_numbers<[1], [0], [0], [1], [0, 0, 1, 1], [], []>} : vector<8x128xf32>, vector<128x256xf32>, vector<8x256xf32> -> vector<8x256xf32>
    %89 = arith.addf %87, %88 : vector<8x256xf32>
    %90 = vector.extract_strided_slice %89 {offsets = [0, 0], sizes = [8, 128], strides = [1, 1]} : vector<8x256xf32> to vector<8x128xf32>
    %91 = vector.extract_strided_slice %89 {offsets = [0, 128], sizes = [8, 128], strides = [1, 1]} : vector<8x256xf32> to vector<8x128xf32>
    %92 = vector.extract_strided_slice %86 {offsets = [0, 128], sizes = [8, 128], strides = [1, 1]} : vector<8x256xf32> to vector<8x128xf32>
    %93 = arith.addf %91, %92 : vector<8x128xf32>
    %94 = arith.addf %72, %93 : vector<8x128xf32>
    %95 = vector.extract_strided_slice %86 {offsets = [0, 0], sizes = [8, 128], strides = [1, 1]} : vector<8x256xf32> to vector<8x128xf32>
    %96 = arith.addf %90, %95 : vector<8x128xf32>
    %cst_35 = arith.constant dense<0.000000e+00> : vector<8x128xf32>
    %97 = tpu.matmul %93, %6, %cst_35 {dimension_numbers = #tpu.dot_dimension_numbers<[1], [0], [0], [1], [0, 0, 1, 1], [], []>} : vector<8x128xf32>, vector<128x128xf32>, vector<8x128xf32> -> vector<8x128xf32>
    %98 = arith.addf %96, %97 : vector<8x128xf32>
    %99 = math.tanh %98 : vector<8x128xf32>
    %c4_i32 = arith.constant 4 : i32
    %100 = vector.broadcast %c4_i32 : i32 to vector<8x8xi32>
    %101 = arith.cmpi eq, %9, %100 : vector<8x8xi32>
    %cst_36 = arith.constant 0.000000e+00 : f32
    %102 = vector.broadcast %cst_36 : f32 to vector<8x8xf32>
    %103 = arith.select %101, %8, %102 : vector<8x8xi1>, vector<8x8xf32>
    %cst_37 = arith.constant dense<0.000000e+00> : vector<8xf32>
    %104 = vector.multi_reduction <add>, %103, %cst_37 [1] : vector<8x8xf32> to vector<8xf32>
    %105 = vector.shape_cast %104 : vector<8xf32> to vector<8x1xf32>
    %106 = vector.broadcast %105 : vector<8x1xf32> to vector<8x256xf32>
    %107 = vector.broadcast %3 : vector<1x256xf32> to vector<8x256xf32>
    %108 = arith.mulf %106, %107 : vector<8x256xf32>
    %cst_38 = arith.constant dense<0.000000e+00> : vector<8x256xf32>
    %109 = tpu.matmul %99, %4, %cst_38 {dimension_numbers = #tpu.dot_dimension_numbers<[1], [0], [0], [1], [0, 0, 1, 1], [], []>} : vector<8x128xf32>, vector<128x256xf32>, vector<8x256xf32> -> vector<8x256xf32>
    %cst_39 = arith.constant dense<0.000000e+00> : vector<8x256xf32>
    %110 = tpu.matmul %94, %5, %cst_39 {dimension_numbers = #tpu.dot_dimension_numbers<[1], [0], [0], [1], [0, 0, 1, 1], [], []>} : vector<8x128xf32>, vector<128x256xf32>, vector<8x256xf32> -> vector<8x256xf32>
    %111 = arith.addf %109, %110 : vector<8x256xf32>
    %112 = vector.extract_strided_slice %111 {offsets = [0, 0], sizes = [8, 128], strides = [1, 1]} : vector<8x256xf32> to vector<8x128xf32>
    %113 = vector.extract_strided_slice %111 {offsets = [0, 128], sizes = [8, 128], strides = [1, 1]} : vector<8x256xf32> to vector<8x128xf32>
    %114 = vector.extract_strided_slice %108 {offsets = [0, 128], sizes = [8, 128], strides = [1, 1]} : vector<8x256xf32> to vector<8x128xf32>
    %115 = arith.addf %113, %114 : vector<8x128xf32>
    %116 = arith.addf %94, %115 : vector<8x128xf32>
    %117 = vector.extract_strided_slice %108 {offsets = [0, 0], sizes = [8, 128], strides = [1, 1]} : vector<8x256xf32> to vector<8x128xf32>
    %118 = arith.addf %112, %117 : vector<8x128xf32>
    %cst_40 = arith.constant dense<0.000000e+00> : vector<8x128xf32>
    %119 = tpu.matmul %115, %6, %cst_40 {dimension_numbers = #tpu.dot_dimension_numbers<[1], [0], [0], [1], [0, 0, 1, 1], [], []>} : vector<8x128xf32>, vector<128x128xf32>, vector<8x128xf32> -> vector<8x128xf32>
    %120 = arith.addf %118, %119 : vector<8x128xf32>
    %121 = math.tanh %120 : vector<8x128xf32>
    %c5_i32 = arith.constant 5 : i32
    %122 = vector.broadcast %c5_i32 : i32 to vector<8x8xi32>
    %123 = arith.cmpi eq, %9, %122 : vector<8x8xi32>
    %cst_41 = arith.constant 0.000000e+00 : f32
    %124 = vector.broadcast %cst_41 : f32 to vector<8x8xf32>
    %125 = arith.select %123, %8, %124 : vector<8x8xi1>, vector<8x8xf32>
    %cst_42 = arith.constant dense<0.000000e+00> : vector<8xf32>
    %126 = vector.multi_reduction <add>, %125, %cst_42 [1] : vector<8x8xf32> to vector<8xf32>
    %127 = vector.shape_cast %126 : vector<8xf32> to vector<8x1xf32>
    %128 = vector.broadcast %127 : vector<8x1xf32> to vector<8x256xf32>
    %129 = vector.broadcast %3 : vector<1x256xf32> to vector<8x256xf32>
    %130 = arith.mulf %128, %129 : vector<8x256xf32>
    %cst_43 = arith.constant dense<0.000000e+00> : vector<8x256xf32>
    %131 = tpu.matmul %121, %4, %cst_43 {dimension_numbers = #tpu.dot_dimension_numbers<[1], [0], [0], [1], [0, 0, 1, 1], [], []>} : vector<8x128xf32>, vector<128x256xf32>, vector<8x256xf32> -> vector<8x256xf32>
    %cst_44 = arith.constant dense<0.000000e+00> : vector<8x256xf32>
    %132 = tpu.matmul %116, %5, %cst_44 {dimension_numbers = #tpu.dot_dimension_numbers<[1], [0], [0], [1], [0, 0, 1, 1], [], []>} : vector<8x128xf32>, vector<128x256xf32>, vector<8x256xf32> -> vector<8x256xf32>
    %133 = arith.addf %131, %132 : vector<8x256xf32>
    %134 = vector.extract_strided_slice %133 {offsets = [0, 0], sizes = [8, 128], strides = [1, 1]} : vector<8x256xf32> to vector<8x128xf32>
    %135 = vector.extract_strided_slice %133 {offsets = [0, 128], sizes = [8, 128], strides = [1, 1]} : vector<8x256xf32> to vector<8x128xf32>
    %136 = vector.extract_strided_slice %130 {offsets = [0, 128], sizes = [8, 128], strides = [1, 1]} : vector<8x256xf32> to vector<8x128xf32>
    %137 = arith.addf %135, %136 : vector<8x128xf32>
    %138 = arith.addf %116, %137 : vector<8x128xf32>
    %139 = vector.extract_strided_slice %130 {offsets = [0, 0], sizes = [8, 128], strides = [1, 1]} : vector<8x256xf32> to vector<8x128xf32>
    %140 = arith.addf %134, %139 : vector<8x128xf32>
    %cst_45 = arith.constant dense<0.000000e+00> : vector<8x128xf32>
    %141 = tpu.matmul %137, %6, %cst_45 {dimension_numbers = #tpu.dot_dimension_numbers<[1], [0], [0], [1], [0, 0, 1, 1], [], []>} : vector<8x128xf32>, vector<128x128xf32>, vector<8x128xf32> -> vector<8x128xf32>
    %142 = arith.addf %140, %141 : vector<8x128xf32>
    %143 = math.tanh %142 : vector<8x128xf32>
    %c6_i32 = arith.constant 6 : i32
    %144 = vector.broadcast %c6_i32 : i32 to vector<8x8xi32>
    %145 = arith.cmpi eq, %9, %144 : vector<8x8xi32>
    %cst_46 = arith.constant 0.000000e+00 : f32
    %146 = vector.broadcast %cst_46 : f32 to vector<8x8xf32>
    %147 = arith.select %145, %8, %146 : vector<8x8xi1>, vector<8x8xf32>
    %cst_47 = arith.constant dense<0.000000e+00> : vector<8xf32>
    %148 = vector.multi_reduction <add>, %147, %cst_47 [1] : vector<8x8xf32> to vector<8xf32>
    %149 = vector.shape_cast %148 : vector<8xf32> to vector<8x1xf32>
    %150 = vector.broadcast %149 : vector<8x1xf32> to vector<8x256xf32>
    %151 = vector.broadcast %3 : vector<1x256xf32> to vector<8x256xf32>
    %152 = arith.mulf %150, %151 : vector<8x256xf32>
    %cst_48 = arith.constant dense<0.000000e+00> : vector<8x256xf32>
    %153 = tpu.matmul %143, %4, %cst_48 {dimension_numbers = #tpu.dot_dimension_numbers<[1], [0], [0], [1], [0, 0, 1, 1], [], []>} : vector<8x128xf32>, vector<128x256xf32>, vector<8x256xf32> -> vector<8x256xf32>
    %cst_49 = arith.constant dense<0.000000e+00> : vector<8x256xf32>
    %154 = tpu.matmul %138, %5, %cst_49 {dimension_numbers = #tpu.dot_dimension_numbers<[1], [0], [0], [1], [0, 0, 1, 1], [], []>} : vector<8x128xf32>, vector<128x256xf32>, vector<8x256xf32> -> vector<8x256xf32>
    %155 = arith.addf %153, %154 : vector<8x256xf32>
    %156 = vector.extract_strided_slice %155 {offsets = [0, 0], sizes = [8, 128], strides = [1, 1]} : vector<8x256xf32> to vector<8x128xf32>
    %157 = vector.extract_strided_slice %155 {offsets = [0, 128], sizes = [8, 128], strides = [1, 1]} : vector<8x256xf32> to vector<8x128xf32>
    %158 = vector.extract_strided_slice %152 {offsets = [0, 128], sizes = [8, 128], strides = [1, 1]} : vector<8x256xf32> to vector<8x128xf32>
    %159 = arith.addf %157, %158 : vector<8x128xf32>
    %160 = arith.addf %138, %159 : vector<8x128xf32>
    %161 = vector.extract_strided_slice %152 {offsets = [0, 0], sizes = [8, 128], strides = [1, 1]} : vector<8x256xf32> to vector<8x128xf32>
    %162 = arith.addf %156, %161 : vector<8x128xf32>
    %cst_50 = arith.constant dense<0.000000e+00> : vector<8x128xf32>
    %163 = tpu.matmul %159, %6, %cst_50 {dimension_numbers = #tpu.dot_dimension_numbers<[1], [0], [0], [1], [0, 0, 1, 1], [], []>} : vector<8x128xf32>, vector<128x128xf32>, vector<8x128xf32> -> vector<8x128xf32>
    %164 = arith.addf %162, %163 : vector<8x128xf32>
    %165 = math.tanh %164 : vector<8x128xf32>
    %c7_i32 = arith.constant 7 : i32
    %166 = vector.broadcast %c7_i32 : i32 to vector<8x8xi32>
    %167 = arith.cmpi eq, %9, %166 : vector<8x8xi32>
    %cst_51 = arith.constant 0.000000e+00 : f32
    %168 = vector.broadcast %cst_51 : f32 to vector<8x8xf32>
    %169 = arith.select %167, %8, %168 : vector<8x8xi1>, vector<8x8xf32>
    %cst_52 = arith.constant dense<0.000000e+00> : vector<8xf32>
    %170 = vector.multi_reduction <add>, %169, %cst_52 [1] : vector<8x8xf32> to vector<8xf32>
    %171 = vector.shape_cast %170 : vector<8xf32> to vector<8x1xf32>
    %172 = vector.broadcast %171 : vector<8x1xf32> to vector<8x256xf32>
    %173 = vector.broadcast %3 : vector<1x256xf32> to vector<8x256xf32>
    %174 = arith.mulf %172, %173 : vector<8x256xf32>
    %cst_53 = arith.constant dense<0.000000e+00> : vector<8x256xf32>
    %175 = tpu.matmul %165, %4, %cst_53 {dimension_numbers = #tpu.dot_dimension_numbers<[1], [0], [0], [1], [0, 0, 1, 1], [], []>} : vector<8x128xf32>, vector<128x256xf32>, vector<8x256xf32> -> vector<8x256xf32>
    %cst_54 = arith.constant dense<0.000000e+00> : vector<8x256xf32>
    %176 = tpu.matmul %160, %5, %cst_54 {dimension_numbers = #tpu.dot_dimension_numbers<[1], [0], [0], [1], [0, 0, 1, 1], [], []>} : vector<8x128xf32>, vector<128x256xf32>, vector<8x256xf32> -> vector<8x256xf32>
    %177 = arith.addf %175, %176 : vector<8x256xf32>
    %178 = vector.extract_strided_slice %177 {offsets = [0, 0], sizes = [8, 128], strides = [1, 1]} : vector<8x256xf32> to vector<8x128xf32>
    %179 = vector.extract_strided_slice %177 {offsets = [0, 128], sizes = [8, 128], strides = [1, 1]} : vector<8x256xf32> to vector<8x128xf32>
    %180 = vector.extract_strided_slice %174 {offsets = [0, 128], sizes = [8, 128], strides = [1, 1]} : vector<8x256xf32> to vector<8x128xf32>
    %181 = arith.addf %179, %180 : vector<8x128xf32>
    %182 = arith.addf %160, %181 : vector<8x128xf32>
    %183 = vector.extract_strided_slice %174 {offsets = [0, 0], sizes = [8, 128], strides = [1, 1]} : vector<8x256xf32> to vector<8x128xf32>
    %184 = arith.addf %178, %183 : vector<8x128xf32>
    %cst_55 = arith.constant dense<0.000000e+00> : vector<8x128xf32>
    %185 = tpu.matmul %181, %6, %cst_55 {dimension_numbers = #tpu.dot_dimension_numbers<[1], [0], [0], [1], [0, 0, 1, 1], [], []>} : vector<8x128xf32>, vector<128x128xf32>, vector<8x128xf32> -> vector<8x128xf32>
    %186 = arith.addf %184, %185 : vector<8x128xf32>
    %187 = math.tanh %186 : vector<8x128xf32>
    %c8_i32 = arith.constant 8 : i32
    %c0_56 = arith.constant 0 : index
    %c0_57 = arith.constant 0 : index
    %188 = vector.load %arg10[%c0_56, %c0_57] : memref<8x128xf32, #tpu.memory_space<vmem>>, vector<8x128xf32>
    tpu.vector_store %arg10[%c0_56, %c0_57], %187 {strides = array<i32>} : memref<8x128xf32, #tpu.memory_space<vmem>>, vector<8x128xf32>,
    %c0_58 = arith.constant 0 : index
    %c0_59 = arith.constant 0 : index
    %189 = vector.load %arg11[%c0_58, %c0_59] : memref<8x128xf32, #tpu.memory_space<vmem>>, vector<8x128xf32>
    tpu.vector_store %arg11[%c0_58, %c0_59], %182 {strides = array<i32>} : memref<8x128xf32, #tpu.memory_space<vmem>>, vector<8x128xf32>,
    %c0_i32_60 = arith.constant 0 : i32
    %190 = arith.cmpi eq, %arg1, %c0_i32_60 : i32
    %191 = arith.extui %190 : i1 to i32
    %c0_i32_61 = arith.constant 0 : i32
    %192 = arith.cmpi ne, %191, %c0_i32_61 : i32
    scf.if %192 {
      %c0_62 = arith.constant 0 : index
      %c0_63 = arith.constant 0 : index
      %193 = vector.load %arg7[%c0_62, %c0_63] : memref<128x128xf32, #tpu.memory_space<vmem>>, vector<128x128xf32>
      %cst_64 = arith.constant dense<0.000000e+00> : vector<8x128xf32>
      %194 = tpu.matmul %187, %193, %cst_64 {dimension_numbers = #tpu.dot_dimension_numbers<[1], [0], [0], [1], [0, 0, 1, 1], [], []>} : vector<8x128xf32>, vector<128x128xf32>, vector<8x128xf32> -> vector<8x128xf32>
      %c0_65 = arith.constant 0 : index
      %c0_66 = arith.constant 0 : index
      %195 = vector.load %arg8[%c0_65, %c0_66] : memref<1x128xf32, #tpu.memory_space<vmem>>, vector<1x128xf32>
      %196 = vector.broadcast %195 : vector<1x128xf32> to vector<8x128xf32>
      %197 = arith.addf %194, %196 : vector<8x128xf32>
      %198 = tpu.iota {dimensions = array<i32: 1>} : vector<8x128xi32>
      %c10_i32 = arith.constant 10 : i32
      %199 = vector.broadcast %c10_i32 : i32 to vector<8x128xi32>
      %200 = arith.cmpi slt, %198, %199 : vector<8x128xi32>
      %cst_67 = arith.constant -1.000000e+30 : f32
      %201 = vector.broadcast %cst_67 : f32 to vector<8x128xf32>
      %202 = arith.select %200, %197, %201 : vector<8x128xi1>, vector<8x128xf32>
      %cst_68 = arith.constant dense<0xFF800000> : vector<8xf32>
      %203 = vector.multi_reduction <maximumf>, %202, %cst_68 [1] : vector<8x128xf32> to vector<8xf32>
      %204 = vector.shape_cast %203 : vector<8xf32> to vector<8x1xf32>
      %205 = vector.broadcast %204 : vector<8x1xf32> to vector<8x128xf32>
      %206 = arith.subf %202, %205 : vector<8x128xf32>
      %207 = math.exp %206 : vector<8x128xf32>
      %cst_69 = arith.constant dense<0.000000e+00> : vector<8xf32>
      %208 = vector.multi_reduction <add>, %207, %cst_69 [1] : vector<8x128xf32> to vector<8xf32>
      %209 = vector.shape_cast %208 : vector<8xf32> to vector<8x1xf32>
      %210 = vector.broadcast %209 : vector<8x1xf32> to vector<8x128xf32>
      %211 = arith.divf %207, %210 : vector<8x128xf32>
      %c0_70 = arith.constant 0 : index
      %c0_71 = arith.constant 0 : index
      %212 = vector.load %arg9[%c0_70, %c0_71] : memref<8x128xf32, #tpu.memory_space<vmem>>, vector<8x128xf32>
      tpu.vector_store %arg9[%c0_70, %c0_71], %211 {strides = array<i32>} : memref<8x128xf32, #tpu.memory_space<vmem>>, vector<8x128xf32>,
    } else {
    }
    return
  }
  func.func @transform_0(%arg0: i32, %arg1: i32) -> (i32, i32, i32, i32) {
    %c0_i32 = arith.constant 0 : i32
    %c0_i32_0 = arith.constant 0 : i32
    %c0_i32_1 = arith.constant 0 : i32
    return %arg0, %arg1, %c0_i32, %c0_i32_0 : i32, i32, i32, i32
  }
  func.func @transform_1(%arg0: i32, %arg1: i32) -> (i32, i32) {
    %c0_i32 = arith.constant 0 : i32
    %c0_i32_0 = arith.constant 0 : i32
    %c0_i32_1 = arith.constant 0 : i32
    return %c0_i32, %c0_i32_0 : i32, i32
  }
  func.func @transform_2(%arg0: i32, %arg1: i32) -> (i32, i32) {
    %c0_i32 = arith.constant 0 : i32
    %c0_i32_0 = arith.constant 0 : i32
    %c0_i32_1 = arith.constant 0 : i32
    return %c0_i32, %c0_i32_0 : i32, i32
  }
  func.func @transform_3(%arg0: i32, %arg1: i32) -> (i32, i32) {
    %c0_i32 = arith.constant 0 : i32
    %c0_i32_0 = arith.constant 0 : i32
    %c0_i32_1 = arith.constant 0 : i32
    return %c0_i32, %c0_i32_0 : i32, i32
  }
  func.func @transform_4(%arg0: i32, %arg1: i32) -> (i32, i32) {
    %c0_i32 = arith.constant 0 : i32
    %c0_i32_0 = arith.constant 0 : i32
    %c0_i32_1 = arith.constant 0 : i32
    return %c0_i32, %c0_i32_0 : i32, i32
  }
  func.func @transform_5(%arg0: i32, %arg1: i32) -> (i32, i32) {
    %c0_i32 = arith.constant 0 : i32
    %c0_i32_0 = arith.constant 0 : i32
    %c0_i32_1 = arith.constant 0 : i32
    return %c0_i32, %c0_i32_0 : i32, i32
  }
  func.func @transform_6(%arg0: i32, %arg1: i32) -> (i32, i32) {
    %c0_i32 = arith.constant 0 : i32
    %c0_i32_0 = arith.constant 0 : i32
    %c0_i32_1 = arith.constant 0 : i32
    return %c0_i32, %c0_i32_0 : i32, i32
  }
  func.func @transform_7(%arg0: i32, %arg1: i32) -> (i32, i32) {
    %c0_i32 = arith.constant 0 : i32
    %c0_i32_0 = arith.constant 0 : i32
    return %arg0, %c0_i32 : i32, i32
  }
}

</mosaic_0001>

<llo_original>
// kernel: lmu_forward.1
$region0: #{lmu_forward.1}
  #allocation0 [shape = 'u32[]', space=smem, size = 0x4, offset = 0x4, fixed_abs, tag = 'smem constant byte address 0x4 - core index']
  #allocation1 [shape = 'u32[144,128]{1,0:T(1,128)}', space=vmem, size = 0x12000, scoped, tag = 'internal scratch']
  #allocation2 [shape = 'f32[8,128]{1,0:T(8,128)}', space=vmem, size = 0x1000, scoped, tag = 'scratch operand']
  #allocation3 [shape = 'f32[8,128]{1,0:T(8,128)}', space=vmem, size = 0x1000, scoped, tag = 'scratch operand']
  %s0 = inlined_call_operand.vmem [shape: f32[1,1,8,8], index: 0, kind: input, shape index: {}]
  %s1 = inlined_call_operand.vmem [shape: f32[1,256], index: 1, kind: input, shape index: {}]
  %s2 = inlined_call_operand.vmem [shape: f32[128,256], index: 2, kind: input, shape index: {}]
  %s3 = inlined_call_operand.vmem [shape: f32[128,256], index: 3, kind: input, shape index: {}]
  %s4 = inlined_call_operand.vmem [shape: f32[128,128], index: 4, kind: input, shape index: {}]
  %s5 = inlined_call_operand.vmem [shape: f32[128,128], index: 5, kind: input, shape index: {}]
  %s6 = inlined_call_operand.vmem [shape: f32[1,128], index: 6, kind: input, shape index: {}]
  %s7 = inlined_call_operand.vmem [shape: f32[8,128], index: 7, kind: output, shape index: {}]
  %s8 = sld [smem:[#allocation0]]
  $region46: #{lmu_forward.1} parent=0
    _
  %s10 = ssub.s32 1, %s8
  %s11 = scalar_select 0, %s10, %s8
  // Predicated region
  $region2: #{lmu_forward.1} parent=0 // pred_check
    _
  $region3: #{lmu_forward.1} parent=0 // pred_check_branch
    %13 = sbr.rel (0) target = $region5
  $region4: #{lmu_forward.1} parent=0 // pred_region
    _
  $region5: #{lmu_forward.1} parent=0 // pred_fallthru
    _
  // Predicated region
  $region6: #{lmu_forward.1} parent=0 // pred_check
    _
  $region7: #{lmu_forward.1} parent=0 // pred_check_branch
    %15 = sbr.rel (0) target = $region9
  $region8: #{lmu_forward.1} parent=0 // pred_region
    _
  $region9: #{lmu_forward.1} parent=0 // pred_fallthru
    _
  // Predicated region
  $region10: #{lmu_forward.1} parent=0 // pred_check
    _
  $region11: #{lmu_forward.1} parent=0 // pred_check_branch
    %17 = sbr.rel (0) target = $region13
  $region12: #{lmu_forward.1} parent=0 // pred_region
    _
  $region13: #{lmu_forward.1} parent=0 // pred_fallthru
    _
  // Predicated region
  $region14: #{lmu_forward.1} parent=0 // pred_check
    _
  $region15: #{lmu_forward.1} parent=0 // pred_check_branch
    %19 = sbr.rel (0) target = $region17
  $region16: #{lmu_forward.1} parent=0 // pred_region
    _
  $region17: #{lmu_forward.1} parent=0 // pred_fallthru
    _
  // Predicated region
  $region18: #{lmu_forward.1} parent=0 // pred_check
    _
  $region19: #{lmu_forward.1} parent=0 // pred_check_branch
    %21 = sbr.rel (0) target = $region21
  $region20: #{lmu_forward.1} parent=0 // pred_region
    _
  $region21: #{lmu_forward.1} parent=0 // pred_fallthru
    _
  // Predicated region
  $region22: #{lmu_forward.1} parent=0 // pred_check
    _
  $region23: #{lmu_forward.1} parent=0 // pred_check_branch
    %23 = sbr.rel (0) target = $region25
  $region24: #{lmu_forward.1} parent=0 // pred_region
    _
  $region25: #{lmu_forward.1} parent=0 // pred_fallthru
    _
  // Predicated region
  $region26: #{lmu_forward.1} parent=0 // pred_check
    _
  $region27: #{lmu_forward.1} parent=0 // pred_check_branch
    %25 = sbr.rel (0) target = $region29
  $region28: #{lmu_forward.1} parent=0 // pred_region
    _
  $region29: #{lmu_forward.1} parent=0 // pred_fallthru
    _
  %p26 = scmp.eq.s32.totalorder 0, 0
  // Predicated region
  $region30: #{lmu_forward.1} parent=0 // pred_check
    %p27 = pneg %p26
  $region31: #{lmu_forward.1} parent=0 // pred_check_branch
    %29 = sbr.rel (%p27) target = $region33
  $region32: #{lmu_forward.1} parent=0 // pred_region
    %30 = vst [vmem:[#allocation2] sm:$0xff] 0.0
    %31 = vst [vmem:[#allocation3] sm:$0xff] 0.0
  $region33: #{lmu_forward.1} parent=0 // pred_fallthru
    _
  %v32 = vld [vmem:[%s1] sm:$0x3]
  %v33 = vld [vmem:[%s2] sm:$0xff]
  %v34 = vld [vmem:[%s2 + $0x8] sm:$0xff]
  %v35 = vld [vmem:[%s2 + $0x10] sm:$0xff]
  %v36 = vld [vmem:[%s2 + $0x18] sm:$0xff]
  %v37 = vld [vmem:[%s2 + $0x20] sm:$0xff]
  %v38 = vld [vmem:[%s2 + $0x28] sm:$0xff]
  %v39 = vld [vmem:[%s2 + $0x30] sm:$0xff]
  %v40 = vld [vmem:[%s2 + $0x38] sm:$0xff]
  %v41 = vld [vmem:[%s2 + $0x40] sm:$0xff]
  %v42 = vld [vmem:[%s2 + $0x48] sm:$0xff]
  %v43 = vld [vmem:[%s2 + $0x50] sm:$0xff]
  %v44 = vld [vmem:[%s2 + $0x58] sm:$0xff]
  %v45 = vld [vmem:[%s2 + $0x60] sm:$0xff]
  %v46 = vld [vmem:[%s2 + $0x68] sm:$0xff]
  %v47 = vld [vmem:[%s2 + $0x70] sm:$0xff]
  %v48 = vld [vmem:[%s2 + $0x78] sm:$0xff]
  %v49 = vld [vmem:[%s2 + $0x80] sm:$0xff]
  %v50 = vld [vmem:[%s2 + $0x88] sm:$0xff]
  %v51 = vld [vmem:[%s2 + $0x90] sm:$0xff]
  %v52 = vld [vmem:[%s2 + $0x98] sm:$0xff]
  %v53 = vld [vmem:[%s2 + $0xa0] sm:$0xff]
  %v54 = vld [vmem:[%s2 + $0xa8] sm:$0xff]
  %v55 = vld [vmem:[%s2 + $0xb0] sm:$0xff]
  %v56 = vld [vmem:[%s2 + $0xb8] sm:$0xff]
  %v57 = vld [vmem:[%s2 + $0xc0] sm:$0xff]
  %v58 = vld [vmem:[%s2 + $0xc8] sm:$0xff]
  %v59 = vld [vmem:[%s2 + $0xd0] sm:$0xff]
  %v60 = vld [vmem:[%s2 + $0xd8] sm:$0xff]
  %v61 = vld [vmem:[%s2 + $0xe0] sm:$0xff]
  %v62 = vld [vmem:[%s2 + $0xe8] sm:$0xff]
  %v63 = vld [vmem:[%s2 + $0xf0] sm:$0xff]
  %v64 = vld [vmem:[%s2 + $0xf8] sm:$0xff]
  %v65 = vld [vmem:[%s3] sm:$0xff]
  %v66 = vld [vmem:[%s3 + $0x8] sm:$0xff]
  %v67 = vld [vmem:[%s3 + $0x10] sm:$0xff]
  %v68 = vld [vmem:[%s3 + $0x18] sm:$0xff]
  %v69 = vld [vmem:[%s3 + $0x20] sm:$0xff]
  %v70 = vld [vmem:[%s3 + $0x28] sm:$0xff]
  %v71 = vld [vmem:[%s3 + $0x30] sm:$0xff]
  %v72 = vld [vmem:[%s3 + $0x38] sm:$0xff]
  %v73 = vld [vmem:[%s3 + $0x40] sm:$0xff]
  %v74 = vld [vmem:[%s3 + $0x48] sm:$0xff]
  %v75 = vld [vmem:[%s3 + $0x50] sm:$0xff]
  %v76 = vld [vmem:[%s3 + $0x58] sm:$0xff]
  %v77 = vld [vmem:[%s3 + $0x60] sm:$0xff]
  %v78 = vld [vmem:[%s3 + $0x68] sm:$0xff]
  %v79 = vld [vmem:[%s3 + $0x70] sm:$0xff]
  %v80 = vld [vmem:[%s3 + $0x78] sm:$0xff]
  %v81 = vld [vmem:[%s3 + $0x80] sm:$0xff]
  %v82 = vld [vmem:[%s3 + $0x88] sm:$0xff]
  %v83 = vld [vmem:[%s3 + $0x90] sm:$0xff]
  %v84 = vld [vmem:[%s3 + $0x98] sm:$0xff]
  %v85 = vld [vmem:[%s3 + $0xa0] sm:$0xff]
  %v86 = vld [vmem:[%s3 + $0xa8] sm:$0xff]
  %v87 = vld [vmem:[%s3 + $0xb0] sm:$0xff]
  %v88 = vld [vmem:[%s3 + $0xb8] sm:$0xff]
  %v89 = vld [vmem:[%s3 + $0xc0] sm:$0xff]
  %v90 = vld [vmem:[%s3 + $0xc8] sm:$0xff]
  %v91 = vld [vmem:[%s3 + $0xd0] sm:$0xff]
  %v92 = vld [vmem:[%s3 + $0xd8] sm:$0xff]
  %v93 = vld [vmem:[%s3 + $0xe0] sm:$0xff]
  %v94 = vld [vmem:[%s3 + $0xe8] sm:$0xff]
  %v95 = vld [vmem:[%s3 + $0xf0] sm:$0xff]
  %v96 = vld [vmem:[%s3 + $0xf8] sm:$0xff]
  %v97 = vld [vmem:[%s4] sm:$0xff]
  %v98 = vld [vmem:[%s4 + $0x8] sm:$0xff]
  %v99 = vld [vmem:[%s4 + $0x10] sm:$0xff]
  %v100 = vld [vmem:[%s4 + $0x18] sm:$0xff]
  %v101 = vld [vmem:[%s4 + $0x20] sm:$0xff]
  %v102 = vld [vmem:[%s4 + $0x28] sm:$0xff]
  %v103 = vld [vmem:[%s4 + $0x30] sm:$0xff]
  %v104 = vld [vmem:[%s4 + $0x38] sm:$0xff]
  %v105 = vld [vmem:[%s4 + $0x40] sm:$0xff]
  %v106 = vld [vmem:[%s4 + $0x48] sm:$0xff]
  %v107 = vld [vmem:[%s4 + $0x50] sm:$0xff]
  %v108 = vld [vmem:[%s4 + $0x58] sm:$0xff]
  %v109 = vld [vmem:[%s4 + $0x60] sm:$0xff]
  %v110 = vld [vmem:[%s4 + $0x68] sm:$0xff]
  %v111 = vld [vmem:[%s4 + $0x70] sm:$0xff]
  %v112 = vld [vmem:[%s4 + $0x78] sm:$0xff]
  %v113 = vld [vmem:[%s0] sm:$0xff]
  %v114 = vlaneseq
  %v115 = vand.u32 %v114, 127
  %v116 = vld [vmem:[#allocation2] sm:$0xff]
  %v117 = vld [vmem:[#allocation3] sm:$0xff]
  %vm118 = vcmp.eq.s32.totalorder %v115, 0
  %v119 = vsel %vm118, %v113, 0.0
  %vm120 = vcmask 64512
  %v121 = vsel %vm120, %v119, 0.0
  %122 = vadd.xlane.f32.xlu0 %v121
  %v123 = vpop.xlane.xlu0 %122
  %v125 = vlaneseq
  %v126 = vshrl.u32 %v125, 7
  %v127 = vsub.s32 0, %v126
  %v128 = vrot.slane %v32, %v127
  %v129 = vlaneseq
  %v130 = vshrl.u32 %v129, 7
  %v131 = vsub.s32 1, %v130
  %v132 = vrot.slane %v32, %v131
  %v135 = vmul.f32 %v123, %v128
  %v136 = vmul.f32 %v123, %v132
  %137 = vmatprep.subr.mxu0 %v66
  %138 = vmatpush1.msra.mxu0 %v65
  %139 = vmatprep.subr.mxu0 %v68
  %140 = vmatpush1.msra.mxu0 %v67
  %141 = vmatprep.subr.mxu0 %v70
  %142 = vmatpush1.msra.mxu0 %v69
  %143 = vmatprep.subr.mxu0 %v72
  %144 = vmatpush1.msra.mxu0 %v71
  %145 = vmatprep.subr.mxu0 %v74
  %146 = vmatpush1.msra.mxu0 %v73
  %147 = vmatprep.subr.mxu0 %v76
  %148 = vmatpush1.msra.mxu0 %v75
  %149 = vmatprep.subr.mxu0 %v78
  %150 = vmatpush1.msra.mxu0 %v77
  %151 = vmatprep.subr.mxu0 %v80
  %152 = vmatpush1.msra.mxu0 %v79
  %153 = vmatprep.subr.mxu0 %v82
  %154 = vmatpush1.msra.mxu0 %v81
  %155 = vmatprep.subr.mxu0 %v84
  %156 = vmatpush1.msra.mxu0 %v83
  %157 = vmatprep.subr.mxu0 %v86
  %158 = vmatpush1.msra.mxu0 %v85
  %159 = vmatprep.subr.mxu0 %v88
  %160 = vmatpush1.msra.mxu0 %v87
  %161 = vmatprep.subr.mxu0 %v90
  %162 = vmatpush1.msra.mxu0 %v89
  %163 = vmatprep.subr.mxu0 %v92
  %164 = vmatpush1.msra.mxu0 %v91
  %165 = vmatprep.subr.mxu0 %v94
  %166 = vmatpush1.msra.mxu0 %v93
  %167 = vmatprep.subr.mxu0 %v96
  %168 = vmatpush1.msra.mxu0 %v95
  %169 = vmatprep.subr.mxu0 0.0
  %170 = vmatpush1.msra.mxu0 0.0
  %171 = vmatprep.subr.mxu0 0.0
  %172 = vmatpush1.msra.mxu0 0.0
  %173 = vmatprep.subr.mxu0 0.0
  %174 = vmatpush1.msra.mxu0 0.0
  %175 = vmatprep.subr.mxu0 0.0
  %176 = vmatpush1.msra.mxu0 0.0
  %177 = vmatprep.subr.mxu0 0.0
  %178 = vmatpush1.msra.mxu0 0.0
  %179 = vmatprep.subr.mxu0 0.0
  %180 = vmatpush1.msra.mxu0 0.0
  %181 = vmatprep.subr.mxu0 0.0
  %182 = vmatpush1.msra.mxu0 0.0
  %183 = vmatprep.subr.mxu0 0.0
  %184 = vmatpush1.msra.mxu0 0.0
  %185 = vmatprep.subr.mxu0 0.0
  %186 = vmatpush1.msra.mxu0 0.0
  %187 = vmatprep.subr.mxu0 0.0
  %188 = vmatpush1.msra.mxu0 0.0
  %189 = vmatprep.subr.mxu0 0.0
  %190 = vmatpush1.msra.mxu0 0.0
  %191 = vmatprep.subr.mxu0 0.0
  %192 = vmatpush1.msra.mxu0 0.0
  %193 = vmatprep.subr.mxu0 0.0
  %194 = vmatpush1.msra.mxu0 0.0
  %195 = vmatprep.subr.mxu0 0.0
  %196 = vmatpush1.msra.mxu0 0.0
  %197 = vmatprep.subr.mxu0 0.0
  %198 = vmatpush1.msra.mxu0 0.0
  %199 = vmatprep.subr.mxu0 0.0
  %200 = vmatpush1.msra.mxu0 0.0
  %201 = vmatprep.mubr.f32.mxu0 0.0
  %202 = vmatmul.mubr.f32.gmra.mrb[0].mxu0 %v117
  %v203 = vpop.f32.mrb[0].mxu0
  %v204 = vadd.f32 0.0, %v203
  %v205 = vpop.f32.mrb[0].mxu0
  %v206 = vadd.f32 0.0, %v205
  %207 = vdwg.mxu0
  %208 = vmatprep.subr.mxu0 %v34
  %209 = vmatpush1.msra.mxu0 %v33
  %210 = vmatprep.subr.mxu0 %v36
  %211 = vmatpush1.msra.mxu0 %v35
  %212 = vmatprep.subr.mxu0 %v38
  %213 = vmatpush1.msra.mxu0 %v37
  %214 = vmatprep.subr.mxu0 %v40
  %215 = vmatpush1.msra.mxu0 %v39
  %216 = vmatprep.subr.mxu0 %v42
  %217 = vmatpush1.msra.mxu0 %v41
  %218 = vmatprep.subr.mxu0 %v44
  %219 = vmatpush1.msra.mxu0 %v43
  %220 = vmatprep.subr.mxu0 %v46
  %221 = vmatpush1.msra.mxu0 %v45
  %222 = vmatprep.subr.mxu0 %v48
  %223 = vmatpush1.msra.mxu0 %v47
  %224 = vmatprep.subr.mxu0 %v50
  %225 = vmatpush1.msra.mxu0 %v49
  %226 = vmatprep.subr.mxu0 %v52
  %227 = vmatpush1.msra.mxu0 %v51
  %228 = vmatprep.subr.mxu0 %v54
  %229 = vmatpush1.msra.mxu0 %v53
  %230 = vmatprep.subr.mxu0 %v56
  %231 = vmatpush1.msra.mxu0 %v55
  %232 = vmatprep.subr.mxu0 %v58
  %233 = vmatpush1.msra.mxu0 %v57
  %234 = vmatprep.subr.mxu0 %v60
  %235 = vmatpush1.msra.mxu0 %v59
  %236 = vmatprep.subr.mxu0 %v62
  %237 = vmatpush1.msra.mxu0 %v61
  %238 = vmatprep.subr.mxu0 %v64
  %239 = vmatpush1.msra.mxu0 %v63
  %240 = vmatprep.subr.mxu0 0.0
  %241 = vmatpush1.msra.mxu0 0.0
  %242 = vmatprep.subr.mxu0 0.0
  %243 = vmatpush1.msra.mxu0 0.0
  %244 = vmatprep.subr.mxu0 0.0
  %245 = vmatpush1.msra.mxu0 0.0
  %246 = vmatprep.subr.mxu0 0.0
  %247 = vmatpush1.msra.mxu0 0.0
  %248 = vmatprep.subr.mxu0 0.0
  %249 = vmatpush1.msra.mxu0 0.0
  %250 = vmatprep.subr.mxu0 0.0
  %251 = vmatpush1.msra.mxu0 0.0
  %252 = vmatprep.subr.mxu0 0.0
  %253 = vmatpush1.msra.mxu0 0.0
  %254 = vmatprep.subr.mxu0 0.0
  %255 = vmatpush1.msra.mxu0 0.0
  %256 = vmatprep.subr.mxu0 0.0
  %257 = vmatpush1.msra.mxu0 0.0
  %258 = vmatprep.subr.mxu0 0.0
  %259 = vmatpush1.msra.mxu0 0.0
  %260 = vmatprep.subr.mxu0 0.0
  %261 = vmatpush1.msra.mxu0 0.0
  %262 = vmatprep.subr.mxu0 0.0
  %263 = vmatpush1.msra.mxu0 0.0
  %264 = vmatprep.subr.mxu0 0.0
  %265 = vmatpush1.msra.mxu0 0.0
  %266 = vmatprep.subr.mxu0 0.0
  %267 = vmatpush1.msra.mxu0 0.0
  %268 = vmatprep.subr.mxu0 0.0
  %269 = vmatpush1.msra.mxu0 0.0
  %270 = vmatprep.subr.mxu0 0.0
  %271 = vmatpush1.msra.mxu0 0.0
  %272 = vmatprep.mubr.f32.mxu0 0.0
  %273 = vmatmul.mubr.f32.gmra.mrb[0].mxu0 %v116
  %v274 = vpop.f32.mrb[0].mxu0
  %v275 = vadd.f32 %v204, %v274
  %v276 = vpop.f32.mrb[0].mxu0
  %v277 = vadd.f32 %v206, %v276
  %278 = vdwg.mxu0
  %v279 = vadd.f32 %v277, %v136
  %v280 = vadd.f32 %v117, %v279
  %v281 = vadd.f32 %v275, %v135
  %282 = vmatprep.subr.mxu0 0.0
  %283 = vmatpush1.msra.mxu0 %v97
  %284 = vmatprep.subr.mxu0 0.0
  %285 = vmatpush1.msra.mxu0 %v98
  %286 = vmatprep.subr.mxu0 0.0
  %287 = vmatpush1.msra.mxu0 %v99
  %288 = vmatprep.subr.mxu0 0.0
  %289 = vmatpush1.msra.mxu0 %v100
  %290 = vmatprep.subr.mxu0 0.0
  %291 = vmatpush1.msra.mxu0 %v101
  %292 = vmatprep.subr.mxu0 0.0
  %293 = vmatpush1.msra.mxu0 %v102
  %294 = vmatprep.subr.mxu0 0.0
  %295 = vmatpush1.msra.mxu0 %v103
  %296 = vmatprep.subr.mxu0 0.0
  %297 = vmatpush1.msra.mxu0 %v104
  %298 = vmatprep.subr.mxu0 0.0
  %299 = vmatpush1.msra.mxu0 %v105
  %300 = vmatprep.subr.mxu0 0.0
  %301 = vmatpush1.msra.mxu0 %v106
  %302 = vmatprep.subr.mxu0 0.0
  %303 = vmatpush1.msra.mxu0 %v107
  %304 = vmatprep.subr.mxu0 0.0
  %305 = vmatpush1.msra.mxu0 %v108
  %306 = vmatprep.subr.mxu0 0.0
  %307 = vmatpush1.msra.mxu0 %v109
  %308 = vmatprep.subr.mxu0 0.0
  %309 = vmatpush1.msra.mxu0 %v110
  %310 = vmatprep.subr.mxu0 0.0
  %311 = vmatpush1.msra.mxu0 %v111
  %312 = vmatprep.subr.mxu0 0.0
  %313 = vmatpush1.msra.mxu0 %v112
  %314 = vmatprep.subr.mxu0 0.0
  %315 = vmatpush1.msra.mxu0 0.0
  %316 = vmatprep.subr.mxu0 0.0
  %317 = vmatpush1.msra.mxu0 0.0
  %318 = vmatprep.subr.mxu0 0.0
  %319 = vmatpush1.msra.mxu0 0.0
  %320 = vmatprep.subr.mxu0 0.0
  %321 = vmatpush1.msra.mxu0 0.0
  %322 = vmatprep.subr.mxu0 0.0
  %323 = vmatpush1.msra.mxu0 0.0
  %324 = vmatprep.subr.mxu0 0.0
  %325 = vmatpush1.msra.mxu0 0.0
  %326 = vmatprep.subr.mxu0 0.0
  %327 = vmatpush1.msra.mxu0 0.0
  %328 = vmatprep.subr.mxu0 0.0
  %329 = vmatpush1.msra.mxu0 0.0
  %330 = vmatprep.subr.mxu0 0.0
  %331 = vmatpush1.msra.mxu0 0.0
  %332 = vmatprep.subr.mxu0 0.0
  %333 = vmatpush1.msra.mxu0 0.0
  %334 = vmatprep.subr.mxu0 0.0
  %335 = vmatpush1.msra.mxu0 0.0
  %336 = vmatprep.subr.mxu0 0.0
  %337 = vmatpush1.msra.mxu0 0.0
  %338 = vmatprep.subr.mxu0 0.0
  %339 = vmatpush1.msra.mxu0 0.0
  %340 = vmatprep.subr.mxu0 0.0
  %341 = vmatpush1.msra.mxu0 0.0
  %342 = vmatprep.subr.mxu0 0.0
  %343 = vmatpush1.msra.mxu0 0.0
  %344 = vmatprep.subr.mxu0 0.0
  %345 = vmatpush1.msra.mxu0 0.0
  %346 = vmatprep.mubr.f32.mxu0 0.0
  %347 = vmatmul.mubr.f32.gmra.mrb[0].mxu0 %v279
  %v348 = vpop.f32.mrb[0].mxu0
  %v349 = vadd.f32 0.0, %v348
  %v350 = vpop.f32.mrb[0].mxu0
  %351 = vdwg.mxu0
  %v352 = vadd.f32 %v281, %v349
  %v353 = vtanh.pop %v352
  %vm354 = vcmp.eq.s32.totalorder %v115, 1
  %v355 = vsel %vm354, %v113, 0.0
  %v356 = vsel %vm120, %v355, 0.0
  %357 = vadd.xlane.f32.xlu0 %v356
  %v358 = vpop.xlane.xlu0 %357
  %v359 = vmul.f32 %v358, %v128
  %v360 = vmul.f32 %v358, %v132
  %361 = vmatprep.subr.mxu0 %v66
  %362 = vmatpush1.msra.mxu0 %v65
  %363 = vmatprep.subr.mxu0 %v68
  %364 = vmatpush1.msra.mxu0 %v67
  %365 = vmatprep.subr.mxu0 %v70
  %366 = vmatpush1.msra.mxu0 %v69
  %367 = vmatprep.subr.mxu0 %v72
  %368 = vmatpush1.msra.mxu0 %v71
  %369 = vmatprep.subr.mxu0 %v74
  %370 = vmatpush1.msra.mxu0 %v73
  %371 = vmatprep.subr.mxu0 %v76
  %372 = vmatpush1.msra.mxu0 %v75
  %373 = vmatprep.subr.mxu0 %v78
  %374 = vmatpush1.msra.mxu0 %v77
  %375 = vmatprep.subr.mxu0 %v80
  %376 = vmatpush1.msra.mxu0 %v79
  %377 = vmatprep.subr.mxu0 %v82
  %378 = vmatpush1.msra.mxu0 %v81
  %379 = vmatprep.subr.mxu0 %v84
  %380 = vmatpush1.msra.mxu0 %v83
  %381 = vmatprep.subr.mxu0 %v86
  %382 = vmatpush1.msra.mxu0 %v85
  %383 = vmatprep.subr.mxu0 %v88
  %384 = vmatpush1.msra.mxu0 %v87
  %385 = vmatprep.subr.mxu0 %v90
  %386 = vmatpush1.msra.mxu0 %v89
  %387 = vmatprep.subr.mxu0 %v92
  %388 = vmatpush1.msra.mxu0 %v91
  %389 = vmatprep.subr.mxu0 %v94
  %390 = vmatpush1.msra.mxu0 %v93
  %391 = vmatprep.subr.mxu0 %v96
  %392 = vmatpush1.msra.mxu0 %v95
  %393 = vmatprep.subr.mxu0 0.0
  %394 = vmatpush1.msra.mxu0 0.0
  %395 = vmatprep.subr.mxu0 0.0
  %396 = vmatpush1.msra.mxu0 0.0
  %397 = vmatprep.subr.mxu0 0.0
  %398 = vmatpush1.msra.mxu0 0.0
  %399 = vmatprep.subr.mxu0 0.0
  %400 = vmatpush1.msra.mxu0 0.0
  %401 = vmatprep.subr.mxu0 0.0
  %402 = vmatpush1.msra.mxu0 0.0
  %403 = vmatprep.subr.mxu0 0.0
  %404 = vmatpush1.msra.mxu0 0.0
  %405 = vmatprep.subr.mxu0 0.0
  %406 = vmatpush1.msra.mxu0 0.0
  %407 = vmatprep.subr.mxu0 0.0
  %408 = vmatpush1.msra.mxu0 0.0
  %409 = vmatprep.subr.mxu0 0.0
  %410 = vmatpush1.msra.mxu0 0.0
  %411 = vmatprep.subr.mxu0 0.0
  %412 = vmatpush1.msra.mxu0 0.0
  %413 = vmatprep.subr.mxu0 0.0
  %414 = vmatpush1.msra.mxu0 0.0
  %415 = vmatprep.subr.mxu0 0.0
  %416 = vmatpush1.msra.mxu0 0.0
  %417 = vmatprep.subr.mxu0 0.0
  %418 = vmatpush1.msra.mxu0 0.0
  %419 = vmatprep.subr.mxu0 0.0
  %420 = vmatpush1.msra.mxu0 0.0
  %421 = vmatprep.subr.mxu0 0.0
  %422 = vmatpush1.msra.mxu0 0.0
  %423 = vmatprep.subr.mxu0 0.0
  %424 = vmatpush1.msra.mxu0 0.0
  %425 = vmatprep.mubr.f32.mxu0 0.0
  %426 = vmatmul.mubr.f32.gmra.mrb[0].mxu0 %v280
  %v427 = vpop.f32.mrb[0].mxu0
  %v428 = vadd.f32 0.0, %v427
  %v429 = vpop.f32.mrb[0].mxu0
  %v430 = vadd.f32 0.0, %v429
  %431 = vdwg.mxu0
  %432 = vmatprep.subr.mxu0 %v34
  %433 = vmatpush1.msra.mxu0 %v33
  %434 = vmatprep.subr.mxu0 %v36
  %435 = vmatpush1.msra.mxu0 %v35
  %436 = vmatprep.subr.mxu0 %v38
  %437 = vmatpush1.msra.mxu0 %v37
  %438 = vmatprep.subr.mxu0 %v40
  %439 = vmatpush1.msra.mxu0 %v39
  %440 = vmatprep.subr.mxu0 %v42
  %441 = vmatpush1.msra.mxu0 %v41
  %442 = vmatprep.subr.mxu0 %v44
  %443 = vmatpush1.msra.mxu0 %v43
  %444 = vmatprep.subr.mxu0 %v46
  %445 = vmatpush1.msra.mxu0 %v45
  %446 = vmatprep.subr.mxu0 %v48
  %447 = vmatpush1.msra.mxu0 %v47
  %448 = vmatprep.subr.mxu0 %v50
  %449 = vmatpush1.msra.mxu0 %v49
  %450 = vmatprep.subr.mxu0 %v52
  %451 = vmatpush1.msra.mxu0 %v51
  %452 = vmatprep.subr.mxu0 %v54
  %453 = vmatpush1.msra.mxu0 %v53
  %454 = vmatprep.subr.mxu0 %v56
  %455 = vmatpush1.msra.mxu0 %v55
  %456 = vmatprep.subr.mxu0 %v58
  %457 = vmatpush1.msra.mxu0 %v57
  %458 = vmatprep.subr.mxu0 %v60
  %459 = vmatpush1.msra.mxu0 %v59
  %460 = vmatprep.subr.mxu0 %v62
  %461 = vmatpush1.msra.mxu0 %v61
  %462 = vmatprep.subr.mxu0 %v64
  %463 = vmatpush1.msra.mxu0 %v63
  %464 = vmatprep.subr.mxu0 0.0
  %465 = vmatpush1.msra.mxu0 0.0
  %466 = vmatprep.subr.mxu0 0.0
  %467 = vmatpush1.msra.mxu0 0.0
  %468 = vmatprep.subr.mxu0 0.0
  %469 = vmatpush1.msra.mxu0 0.0
  %470 = vmatprep.subr.mxu0 0.0
  %471 = vmatpush1.msra.mxu0 0.0
  %472 = vmatprep.subr.mxu0 0.0
  %473 = vmatpush1.msra.mxu0 0.0
  %474 = vmatprep.subr.mxu0 0.0
  %475 = vmatpush1.msra.mxu0 0.0
  %476 = vmatprep.subr.mxu0 0.0
  %477 = vmatpush1.msra.mxu0 0.0
  %478 = vmatprep.subr.mxu0 0.0
  %479 = vmatpush1.msra.mxu0 0.0
  %480 = vmatprep.subr.mxu0 0.0
  %481 = vmatpush1.msra.mxu0 0.0
  %482 = vmatprep.subr.mxu0 0.0
  %483 = vmatpush1.msra.mxu0 0.0
  %484 = vmatprep.subr.mxu0 0.0
  %485 = vmatpush1.msra.mxu0 0.0
  %486 = vmatprep.subr.mxu0 0.0
  %487 = vmatpush1.msra.mxu0 0.0
  %488 = vmatprep.subr.mxu0 0.0
  %489 = vmatpush1.msra.mxu0 0.0
  %490 = vmatprep.subr.mxu0 0.0
  %491 = vmatpush1.msra.mxu0 0.0
  %492 = vmatprep.subr.mxu0 0.0
  %493 = vmatpush1.msra.mxu0 0.0
  %494 = vmatprep.subr.mxu0 0.0
  %495 = vmatpush1.msra.mxu0 0.0
  %496 = vmatprep.mubr.f32.mxu0 0.0
  %497 = vmatmul.mubr.f32.gmra.mrb[0].mxu0 %v353
  %v498 = vpop.f32.mrb[0].mxu0
  %v499 = vadd.f32 %v428, %v498
  %v500 = vpop.f32.mrb[0].mxu0
  %v501 = vadd.f32 %v430, %v500
  %502 = vdwg.mxu0
  %v503 = vadd.f32 %v501, %v360
  %v504 = vadd.f32 %v280, %v503
  %v505 = vadd.f32 %v499, %v359
  %506 = vmatprep.subr.mxu0 0.0
  %507 = vmatpush1.msra.mxu0 %v97
  %508 = vmatprep.subr.mxu0 0.0
  %509 = vmatpush1.msra.mxu0 %v98
  %510 = vmatprep.subr.mxu0 0.0
  %511 = vmatpush1.msra.mxu0 %v99
  %512 = vmatprep.subr.mxu0 0.0
  %513 = vmatpush1.msra.mxu0 %v100
  %514 = vmatprep.subr.mxu0 0.0
  %515 = vmatpush1.msra.mxu0 %v101
  %516 = vmatprep.subr.mxu0 0.0
  %517 = vmatpush1.msra.mxu0 %v102
  %518 = vmatprep.subr.mxu0 0.0
  %519 = vmatpush1.msra.mxu0 %v103
  %520 = vmatprep.subr.mxu0 0.0
  %521 = vmatpush1.msra.mxu0 %v104
  %522 = vmatprep.subr.mxu0 0.0
  %523 = vmatpush1.msra.mxu0 %v105
  %524 = vmatprep.subr.mxu0 0.0
  %525 = vmatpush1.msra.mxu0 %v106
  %526 = vmatprep.subr.mxu0 0.0
  %527 = vmatpush1.msra.mxu0 %v107
  %528 = vmatprep.subr.mxu0 0.0
  %529 = vmatpush1.msra.mxu0 %v108
  %530 = vmatprep.subr.mxu0 0.0
  %531 = vmatpush1.msra.mxu0 %v109
  %532 = vmatprep.subr.mxu0 0.0
  %533 = vmatpush1.msra.mxu0 %v110
  %534 = vmatprep.subr.mxu0 0.0
  %535 = vmatpush1.msra.mxu0 %v111
  %536 = vmatprep.subr.mxu0 0.0
  %537 = vmatpush1.msra.mxu0 %v112
  %538 = vmatprep.subr.mxu0 0.0
  %539 = vmatpush1.msra.mxu0 0.0
  %540 = vmatprep.subr.mxu0 0.0
  %541 = vmatpush1.msra.mxu0 0.0
  %542 = vmatprep.subr.mxu0 0.0
  %543 = vmatpush1.msra.mxu0 0.0
  %544 = vmatprep.subr.mxu0 0.0
  %545 = vmatpush1.msra.mxu0 0.0
  %546 = vmatprep.subr.mxu0 0.0
  %547 = vmatpush1.msra.mxu0 0.0
  %548 = vmatprep.subr.mxu0 0.0
  %549 = vmatpush1.msra.mxu0 0.0
  %550 = vmatprep.subr.mxu0 0.0
  %551 = vmatpush1.msra.mxu0 0.0
  %552 = vmatprep.subr.mxu0 0.0
  %553 = vmatpush1.msra.mxu0 0.0
  %554 = vmatprep.subr.mxu0 0.0
  %555 = vmatpush1.msra.mxu0 0.0
  %556 = vmatprep.subr.mxu0 0.0
  %557 = vmatpush1.msra.mxu0 0.0
  %558 = vmatprep.subr.mxu0 0.0
  %559 = vmatpush1.msra.mxu0 0.0
  %560 = vmatprep.subr.mxu0 0.0
  %561 = vmatpush1.msra.mxu0 0.0
  %562 = vmatprep.subr.mxu0 0.0
  %563 = vmatpush1.msra.mxu0 0.0
  %564 = vmatprep.subr.mxu0 0.0
  %565 = vmatpush1.msra.mxu0 0.0
  %566 = vmatprep.subr.mxu0 0.0
  %567 = vmatpush1.msra.mxu0 0.0
  %568 = vmatprep.subr.mxu0 0.0
  %569 = vmatpush1.msra.mxu0 0.0
  %570 = vmatprep.mubr.f32.mxu0 0.0
  %571 = vmatmul.mubr.f32.gmra.mrb[0].mxu0 %v503
  %v572 = vpop.f32.mrb[0].mxu0
  %v573 = vadd.f32 0.0, %v572
  %v574 = vpop.f32.mrb[0].mxu0
  %575 = vdwg.mxu0
  %v576 = vadd.f32 %v505, %v573
  %v577 = vtanh.pop %v576
  %vm578 = vcmp.eq.s32.totalorder %v115, 2
  %v579 = vsel %vm578, %v113, 0.0
  %v580 = vsel %vm120, %v579, 0.0
  %581 = vadd.xlane.f32.xlu0 %v580
  %v582 = vpop.xlane.xlu0 %581
  %v583 = vmul.f32 %v582, %v128
  %v584 = vmul.f32 %v582, %v132
  %585 = vmatprep.subr.mxu0 %v66
  %586 = vmatpush1.msra.mxu0 %v65
  %587 = vmatprep.subr.mxu0 %v68
  %588 = vmatpush1.msra.mxu0 %v67
  %589 = vmatprep.subr.mxu0 %v70
  %590 = vmatpush1.msra.mxu0 %v69
  %591 = vmatprep.subr.mxu0 %v72
  %592 = vmatpush1.msra.mxu0 %v71
  %593 = vmatprep.subr.mxu0 %v74
  %594 = vmatpush1.msra.mxu0 %v73
  %595 = vmatprep.subr.mxu0 %v76
  %596 = vmatpush1.msra.mxu0 %v75
  %597 = vmatprep.subr.mxu0 %v78
  %598 = vmatpush1.msra.mxu0 %v77
  %599 = vmatprep.subr.mxu0 %v80
  %600 = vmatpush1.msra.mxu0 %v79
  %601 = vmatprep.subr.mxu0 %v82
  %602 = vmatpush1.msra.mxu0 %v81
  %603 = vmatprep.subr.mxu0 %v84
  %604 = vmatpush1.msra.mxu0 %v83
  %605 = vmatprep.subr.mxu0 %v86
  %606 = vmatpush1.msra.mxu0 %v85
  %607 = vmatprep.subr.mxu0 %v88
  %608 = vmatpush1.msra.mxu0 %v87
  %609 = vmatprep.subr.mxu0 %v90
  %610 = vmatpush1.msra.mxu0 %v89
  %611 = vmatprep.subr.mxu0 %v92
  %612 = vmatpush1.msra.mxu0 %v91
  %613 = vmatprep.subr.mxu0 %v94
  %614 = vmatpush1.msra.mxu0 %v93
  %615 = vmatprep.subr.mxu0 %v96
  %616 = vmatpush1.msra.mxu0 %v95
  %617 = vmatprep.subr.mxu0 0.0
  %618 = vmatpush1.msra.mxu0 0.0
  %619 = vmatprep.subr.mxu0 0.0
  %620 = vmatpush1.msra.mxu0 0.0
  %621 = vmatprep.subr.mxu0 0.0
  %622 = vmatpush1.msra.mxu0 0.0
  %623 = vmatprep.subr.mxu0 0.0
  %624 = vmatpush1.msra.mxu0 0.0
  %625 = vmatprep.subr.mxu0 0.0
  %626 = vmatpush1.msra.mxu0 0.0
  %627 = vmatprep.subr.mxu0 0.0
  %628 = vmatpush1.msra.mxu0 0.0
  %629 = vmatprep.subr.mxu0 0.0
  %630 = vmatpush1.msra.mxu0 0.0
  %631 = vmatprep.subr.mxu0 0.0
  %632 = vmatpush1.msra.mxu0 0.0
  %633 = vmatprep.subr.mxu0 0.0
  %634 = vmatpush1.msra.mxu0 0.0
  %635 = vmatprep.subr.mxu0 0.0
  %636 = vmatpush1.msra.mxu0 0.0
  %637 = vmatprep.subr.mxu0 0.0
  %638 = vmatpush1.msra.mxu0 0.0
  %639 = vmatprep.subr.mxu0 0.0
  %640 = vmatpush1.msra.mxu0 0.0
  %641 = vmatprep.subr.mxu0 0.0
  %642 = vmatpush1.msra.mxu0 0.0
  %643 = vmatprep.subr.mxu0 0.0
  %644 = vmatpush1.msra.mxu0 0.0
  %645 = vmatprep.subr.mxu0 0.0
  %646 = vmatpush1.msra.mxu0 0.0
  %647 = vmatprep.subr.mxu0 0.0
  %648 = vmatpush1.msra.mxu0 0.0
  %649 = vmatprep.mubr.f32.mxu0 0.0
  %650 = vmatmul.mubr.f32.gmra.mrb[0].mxu0 %v504
  %v651 = vpop.f32.mrb[0].mxu0
  %v652 = vadd.f32 0.0, %v651
  %v653 = vpop.f32.mrb[0].mxu0
  %v654 = vadd.f32 0.0, %v653
  %655 = vdwg.mxu0
  %656 = vmatprep.subr.mxu0 %v34
  %657 = vmatpush1.msra.mxu0 %v33
  %658 = vmatprep.subr.mxu0 %v36
  %659 = vmatpush1.msra.mxu0 %v35
  %660 = vmatprep.subr.mxu0 %v38
  %661 = vmatpush1.msra.mxu0 %v37
  %662 = vmatprep.subr.mxu0 %v40
  %663 = vmatpush1.msra.mxu0 %v39
  %664 = vmatprep.subr.mxu0 %v42
  %665 = vmatpush1.msra.mxu0 %v41
  %666 = vmatprep.subr.mxu0 %v44
  %667 = vmatpush1.msra.mxu0 %v43
  %668 = vmatprep.subr.mxu0 %v46
  %669 = vmatpush1.msra.mxu0 %v45
  %670 = vmatprep.subr.mxu0 %v48
  %671 = vmatpush1.msra.mxu0 %v47
  %672 = vmatprep.subr.mxu0 %v50
  %673 = vmatpush1.msra.mxu0 %v49
  %674 = vmatprep.subr.mxu0 %v52
  %675 = vmatpush1.msra.mxu0 %v51
  %676 = vmatprep.subr.mxu0 %v54
  %677 = vmatpush1.msra.mxu0 %v53
  %678 = vmatprep.subr.mxu0 %v56
  %679 = vmatpush1.msra.mxu0 %v55
  %680 = vmatprep.subr.mxu0 %v58
  %681 = vmatpush1.msra.mxu0 %v57
  %682 = vmatprep.subr.mxu0 %v60
  %683 = vmatpush1.msra.mxu0 %v59
  %684 = vmatprep.subr.mxu0 %v62
  %685 = vmatpush1.msra.mxu0 %v61
  %686 = vmatprep.subr.mxu0 %v64
  %687 = vmatpush1.msra.mxu0 %v63
  %688 = vmatprep.subr.mxu0 0.0
  %689 = vmatpush1.msra.mxu0 0.0
  %690 = vmatprep.subr.mxu0 0.0
  %691 = vmatpush1.msra.mxu0 0.0
  %692 = vmatprep.subr.mxu0 0.0
  %693 = vmatpush1.msra.mxu0 0.0
  %694 = vmatprep.subr.mxu0 0.0
  %695 = vmatpush1.msra.mxu0 0.0
  %696 = vmatprep.subr.mxu0 0.0
  %697 = vmatpush1.msra.mxu0 0.0
  %698 = vmatprep.subr.mxu0 0.0
  %699 = vmatpush1.msra.mxu0 0.0
  %700 = vmatprep.subr.mxu0 0.0
  %701 = vmatpush1.msra.mxu0 0.0
  %702 = vmatprep.subr.mxu0 0.0
  %703 = vmatpush1.msra.mxu0 0.0
  %704 = vmatprep.subr.mxu0 0.0
  %705 = vmatpush1.msra.mxu0 0.0
  %706 = vmatprep.subr.mxu0 0.0
  %707 = vmatpush1.msra.mxu0 0.0
  %708 = vmatprep.subr.mxu0 0.0
  %709 = vmatpush1.msra.mxu0 0.0
  %710 = vmatprep.subr.mxu0 0.0
  %711 = vmatpush1.msra.mxu0 0.0
  %712 = vmatprep.subr.mxu0 0.0
  %713 = vmatpush1.msra.mxu0 0.0
  %714 = vmatprep.subr.mxu0 0.0
  %715 = vmatpush1.msra.mxu0 0.0
  %716 = vmatprep.subr.mxu0 0.0
  %717 = vmatpush1.msra.mxu0 0.0
  %718 = vmatprep.subr.mxu0 0.0
  %719 = vmatpush1.msra.mxu0 0.0
  %720 = vmatprep.mubr.f32.mxu0 0.0
  %721 = vmatmul.mubr.f32.gmra.mrb[0].mxu0 %v577
  %v722 = vpop.f32.mrb[0].mxu0
  %v723 = vadd.f32 %v652, %v722
  %v724 = vpop.f32.mrb[0].mxu0
  %v725 = vadd.f32 %v654, %v724
  %726 = vdwg.mxu0
  %v727 = vadd.f32 %v725, %v584
  %v728 = vadd.f32 %v504, %v727
  %v729 = vadd.f32 %v723, %v583
  %730 = vmatprep.subr.mxu0 0.0
  %731 = vmatpush1.msra.mxu0 %v97
  %732 = vmatprep.subr.mxu0 0.0
  %733 = vmatpush1.msra.mxu0 %v98
  %734 = vmatprep.subr.mxu0 0.0
  %735 = vmatpush1.msra.mxu0 %v99
  %736 = vmatprep.subr.mxu0 0.0
  %737 = vmatpush1.msra.mxu0 %v100
  %738 = vmatprep.subr.mxu0 0.0
  %739 = vmatpush1.msra.mxu0 %v101
  %740 = vmatprep.subr.mxu0 0.0
  %741 = vmatpush1.msra.mxu0 %v102
  %742 = vmatprep.subr.mxu0 0.0
  %743 = vmatpush1.msra.mxu0 %v103
  %744 = vmatprep.subr.mxu0 0.0
  %745 = vmatpush1.msra.mxu0 %v104
  %746 = vmatprep.subr.mxu0 0.0
  %747 = vmatpush1.msra.mxu0 %v105
  %748 = vmatprep.subr.mxu0 0.0
  %749 = vmatpush1.msra.mxu0 %v106
  %750 = vmatprep.subr.mxu0 0.0
  %751 = vmatpush1.msra.mxu0 %v107
  %752 = vmatprep.subr.mxu0 0.0
  %753 = vmatpush1.msra.mxu0 %v108
  %754 = vmatprep.subr.mxu0 0.0
  %755 = vmatpush1.msra.mxu0 %v109
  %756 = vmatprep.subr.mxu0 0.0
  %757 = vmatpush1.msra.mxu0 %v110
  %758 = vmatprep.subr.mxu0 0.0
  %759 = vmatpush1.msra.mxu0 %v111
  %760 = vmatprep.subr.mxu0 0.0
  %761 = vmatpush1.msra.mxu0 %v112
  %762 = vmatprep.subr.mxu0 0.0
  %763 = vmatpush1.msra.mxu0 0.0
  %764 = vmatprep.subr.mxu0 0.0
  %765 = vmatpush1.msra.mxu0 0.0
  %766 = vmatprep.subr.mxu0 0.0
  %767 = vmatpush1.msra.mxu0 0.0
  %768 = vmatprep.subr.mxu0 0.0
  %769 = vmatpush1.msra.mxu0 0.0
  %770 = vmatprep.subr.mxu0 0.0
  %771 = vmatpush1.msra.mxu0 0.0
  %772 = vmatprep.subr.mxu0 0.0
  %773 = vmatpush1.msra.mxu0 0.0
  %774 = vmatprep.subr.mxu0 0.0
  %775 = vmatpush1.msra.mxu0 0.0
  %776 = vmatprep.subr.mxu0 0.0
  %777 = vmatpush1.msra.mxu0 0.0
  %778 = vmatprep.subr.mxu0 0.0
  %779 = vmatpush1.msra.mxu0 0.0
  %780 = vmatprep.subr.mxu0 0.0
  %781 = vmatpush1.msra.mxu0 0.0
  %782 = vmatprep.subr.mxu0 0.0
  %783 = vmatpush1.msra.mxu0 0.0
  %784 = vmatprep.subr.mxu0 0.0
  %785 = vmatpush1.msra.mxu0 0.0
  %786 = vmatprep.subr.mxu0 0.0
  %787 = vmatpush1.msra.mxu0 0.0
  %788 = vmatprep.subr.mxu0 0.0
  %789 = vmatpush1.msra.mxu0 0.0
  %790 = vmatprep.subr.mxu0 0.0
  %791 = vmatpush1.msra.mxu0 0.0
  %792 = vmatprep.subr.mxu0 0.0
  %793 = vmatpush1.msra.mxu0 0.0
  %794 = vmatprep.mubr.f32.mxu0 0.0
  %795 = vmatmul.mubr.f32.gmra.mrb[0].mxu0 %v727
  %v796 = vpop.f32.mrb[0].mxu0
  %v797 = vadd.f32 0.0, %v796
  %v798 = vpop.f32.mrb[0].mxu0
  %799 = vdwg.mxu0
  %v800 = vadd.f32 %v729, %v797
  %v801 = vtanh.pop %v800
  %vm802 = vcmp.eq.s32.totalorder %v115, 3
  %v803 = vsel %vm802, %v113, 0.0
  %v804 = vsel %vm120, %v803, 0.0
  %805 = vadd.xlane.f32.xlu0 %v804
  %v806 = vpop.xlane.xlu0 %805
  %v807 = vmul.f32 %v806, %v128
  %v808 = vmul.f32 %v806, %v132
  %809 = vmatprep.subr.mxu0 %v66
  %810 = vmatpush1.msra.mxu0 %v65
  %811 = vmatprep.subr.mxu0 %v68
  %812 = vmatpush1.msra.mxu0 %v67
  %813 = vmatprep.subr.mxu0 %v70
  %814 = vmatpush1.msra.mxu0 %v69
  %815 = vmatprep.subr.mxu0 %v72
  %816 = vmatpush1.msra.mxu0 %v71
  %817 = vmatprep.subr.mxu0 %v74
  %818 = vmatpush1.msra.mxu0 %v73
  %819 = vmatprep.subr.mxu0 %v76
  %820 = vmatpush1.msra.mxu0 %v75
  %821 = vmatprep.subr.mxu0 %v78
  %822 = vmatpush1.msra.mxu0 %v77
  %823 = vmatprep.subr.mxu0 %v80
  %824 = vmatpush1.msra.mxu0 %v79
  %825 = vmatprep.subr.mxu0 %v82
  %826 = vmatpush1.msra.mxu0 %v81
  %827 = vmatprep.subr.mxu0 %v84
  %828 = vmatpush1.msra.mxu0 %v83
  %829 = vmatprep.subr.mxu0 %v86
  %830 = vmatpush1.msra.mxu0 %v85
  %831 = vmatprep.subr.mxu0 %v88
  %832 = vmatpush1.msra.mxu0 %v87
  %833 = vmatprep.subr.mxu0 %v90
  %834 = vmatpush1.msra.mxu0 %v89
  %835 = vmatprep.subr.mxu0 %v92
  %836 = vmatpush1.msra.mxu0 %v91
  %837 = vmatprep.subr.mxu0 %v94
  %838 = vmatpush1.msra.mxu0 %v93
  %839 = vmatprep.subr.mxu0 %v96
  %840 = vmatpush1.msra.mxu0 %v95
  %841 = vmatprep.subr.mxu0 0.0
  %842 = vmatpush1.msra.mxu0 0.0
  %843 = vmatprep.subr.mxu0 0.0
  %844 = vmatpush1.msra.mxu0 0.0
  %845 = vmatprep.subr.mxu0 0.0
  %846 = vmatpush1.msra.mxu0 0.0
  %847 = vmatprep.subr.mxu0 0.0
  %848 = vmatpush1.msra.mxu0 0.0
  %849 = vmatprep.subr.mxu0 0.0
  %850 = vmatpush1.msra.mxu0 0.0
  %851 = vmatprep.subr.mxu0 0.0
  %852 = vmatpush1.msra.mxu0 0.0
  %853 = vmatprep.subr.mxu0 0.0
  %854 = vmatpush1.msra.mxu0 0.0
  %855 = vmatprep.subr.mxu0 0.0
  %856 = vmatpush1.msra.mxu0 0.0
  %857 = vmatprep.subr.mxu0 0.0
  %858 = vmatpush1.msra.mxu0 0.0
  %859 = vmatprep.subr.mxu0 0.0
  %860 = vmatpush1.msra.mxu0 0.0
  %861 = vmatprep.subr.mxu0 0.0
  %862 = vmatpush1.msra.mxu0 0.0
  %863 = vmatprep.subr.mxu0 0.0
  %864 = vmatpush1.msra.mxu0 0.0
  %865 = vmatprep.subr.mxu0 0.0
  %866 = vmatpush1.msra.mxu0 0.0
  %867 = vmatprep.subr.mxu0 0.0
  %868 = vmatpush1.msra.mxu0 0.0
  %869 = vmatprep.subr.mxu0 0.0
  %870 = vmatpush1.msra.mxu0 0.0
  %871 = vmatprep.subr.mxu0 0.0
  %872 = vmatpush1.msra.mxu0 0.0
  %873 = vmatprep.mubr.f32.mxu0 0.0
  %874 = vmatmul.mubr.f32.gmra.mrb[0].mxu0 %v728
  %v875 = vpop.f32.mrb[0].mxu0
  %v876 = vadd.f32 0.0, %v875
  %v877 = vpop.f32.mrb[0].mxu0
  %v878 = vadd.f32 0.0, %v877
  %879 = vdwg.mxu0
  %880 = vmatprep.subr.mxu0 %v34
  %881 = vmatpush1.msra.mxu0 %v33
  %882 = vmatprep.subr.mxu0 %v36
  %883 = vmatpush1.msra.mxu0 %v35
  %884 = vmatprep.subr.mxu0 %v38
  %885 = vmatpush1.msra.mxu0 %v37
  %886 = vmatprep.subr.mxu0 %v40
  %887 = vmatpush1.msra.mxu0 %v39
  %888 = vmatprep.subr.mxu0 %v42
  %889 = vmatpush1.msra.mxu0 %v41
  %890 = vmatprep.subr.mxu0 %v44
  %891 = vmatpush1.msra.mxu0 %v43
  %892 = vmatprep.subr.mxu0 %v46
  %893 = vmatpush1.msra.mxu0 %v45
  %894 = vmatprep.subr.mxu0 %v48
  %895 = vmatpush1.msra.mxu0 %v47
  %896 = vmatprep.subr.mxu0 %v50
  %897 = vmatpush1.msra.mxu0 %v49
  %898 = vmatprep.subr.mxu0 %v52
  %899 = vmatpush1.msra.mxu0 %v51
  %900 = vmatprep.subr.mxu0 %v54
  %901 = vmatpush1.msra.mxu0 %v53
  %902 = vmatprep.subr.mxu0 %v56
  %903 = vmatpush1.msra.mxu0 %v55
  %904 = vmatprep.subr.mxu0 %v58
  %905 = vmatpush1.msra.mxu0 %v57
  %906 = vmatprep.subr.mxu0 %v60
  %907 = vmatpush1.msra.mxu0 %v59
  %908 = vmatprep.subr.mxu0 %v62
  %909 = vmatpush1.msra.mxu0 %v61
  %910 = vmatprep.subr.mxu0 %v64
  %911 = vmatpush1.msra.mxu0 %v63
  %912 = vmatprep.subr.mxu0 0.0
  %913 = vmatpush1.msra.mxu0 0.0
  %914 = vmatprep.subr.mxu0 0.0
  %915 = vmatpush1.msra.mxu0 0.0
  %916 = vmatprep.subr.mxu0 0.0
  %917 = vmatpush1.msra.mxu0 0.0
  %918 = vmatprep.subr.mxu0 0.0
  %919 = vmatpush1.msra.mxu0 0.0
  %920 = vmatprep.subr.mxu0 0.0
  %921 = vmatpush1.msra.mxu0 0.0
  %922 = vmatprep.subr.mxu0 0.0
  %923 = vmatpush1.msra.mxu0 0.0
  %924 = vmatprep.subr.mxu0 0.0
  %925 = vmatpush1.msra.mxu0 0.0
  %926 = vmatprep.subr.mxu0 0.0
  %927 = vmatpush1.msra.mxu0 0.0
  %928 = vmatprep.subr.mxu0 0.0
  %929 = vmatpush1.msra.mxu0 0.0
  %930 = vmatprep.subr.mxu0 0.0
  %931 = vmatpush1.msra.mxu0 0.0
  %932 = vmatprep.subr.mxu0 0.0
  %933 = vmatpush1.msra.mxu0 0.0
  %934 = vmatprep.subr.mxu0 0.0
  %935 = vmatpush1.msra.mxu0 0.0
  %936 = vmatprep.subr.mxu0 0.0
  %937 = vmatpush1.msra.mxu0 0.0
  %938 = vmatprep.subr.mxu0 0.0
  %939 = vmatpush1.msra.mxu0 0.0
  %940 = vmatprep.subr.mxu0 0.0
  %941 = vmatpush1.msra.mxu0 0.0
  %942 = vmatprep.subr.mxu0 0.0
  %943 = vmatpush1.msra.mxu0 0.0
  %944 = vmatprep.mubr.f32.mxu0 0.0
  %945 = vmatmul.mubr.f32.gmra.mrb[0].mxu0 %v801
  %v946 = vpop.f32.mrb[0].mxu0
  %v947 = vadd.f32 %v876, %v946
  %v948 = vpop.f32.mrb[0].mxu0
  %v949 = vadd.f32 %v878, %v948
  %950 = vdwg.mxu0
  %v951 = vadd.f32 %v949, %v808
  %v952 = vadd.f32 %v728, %v951
  %v953 = vadd.f32 %v947, %v807
  %954 = vmatprep.subr.mxu0 0.0
  %955 = vmatpush1.msra.mxu0 %v97
  %956 = vmatprep.subr.mxu0 0.0
  %957 = vmatpush1.msra.mxu0 %v98
  %958 = vmatprep.subr.mxu0 0.0
  %959 = vmatpush1.msra.mxu0 %v99
  %960 = vmatprep.subr.mxu0 0.0
  %961 = vmatpush1.msra.mxu0 %v100
  %962 = vmatprep.subr.mxu0 0.0
  %963 = vmatpush1.msra.mxu0 %v101
  %964 = vmatprep.subr.mxu0 0.0
  %965 = vmatpush1.msra.mxu0 %v102
  %966 = vmatprep.subr.mxu0 0.0
  %967 = vmatpush1.msra.mxu0 %v103
  %968 = vmatprep.subr.mxu0 0.0
  %969 = vmatpush1.msra.mxu0 %v104
  %970 = vmatprep.subr.mxu0 0.0
  %971 = vmatpush1.msra.mxu0 %v105
  %972 = vmatprep.subr.mxu0 0.0
  %973 = vmatpush1.msra.mxu0 %v106
  %974 = vmatprep.subr.mxu0 0.0
  %975 = vmatpush1.msra.mxu0 %v107
  %976 = vmatprep.subr.mxu0 0.0
  %977 = vmatpush1.msra.mxu0 %v108
  %978 = vmatprep.subr.mxu0 0.0
  %979 = vmatpush1.msra.mxu0 %v109
  %980 = vmatprep.subr.mxu0 0.0
  %981 = vmatpush1.msra.mxu0 %v110
  %982 = vmatprep.subr.mxu0 0.0
  %983 = vmatpush1.msra.mxu0 %v111
  %984 = vmatprep.subr.mxu0 0.0
  %985 = vmatpush1.msra.mxu0 %v112
  %986 = vmatprep.subr.mxu0 0.0
  %987 = vmatpush1.msra.mxu0 0.0
  %988 = vmatprep.subr.mxu0 0.0
  %989 = vmatpush1.msra.mxu0 0.0
  %990 = vmatprep.subr.mxu0 0.0
  %991 = vmatpush1.msra.mxu0 0.0
  %992 = vmatprep.subr.mxu0 0.0
  %993 = vmatpush1.msra.mxu0 0.0
  %994 = vmatprep.subr.mxu0 0.0
  %995 = vmatpush1.msra.mxu0 0.0
  %996 = vmatprep.subr.mxu0 0.0
  %997 = vmatpush1.msra.mxu0 0.0
  %998 = vmatprep.subr.mxu0 0.0
  %999 = vmatpush1.msra.mxu0 0.0
  %1000 = vmatprep.subr.mxu0 0.0
  %1001 = vmatpush1.msra.mxu0 0.0
  %1002 = vmatprep.subr.mxu0 0.0
  %1003 = vmatpush1.msra.mxu0 0.0
  %1004 = vmatprep.subr.mxu0 0.0
  %1005 = vmatpush1.msra.mxu0 0.0
  %1006 = vmatprep.subr.mxu0 0.0
  %1007 = vmatpush1.msra.mxu0 0.0
  %1008 = vmatprep.subr.mxu0 0.0
  %1009 = vmatpush1.msra.mxu0 0.0
  %1010 = vmatprep.subr.mxu0 0.0
  %1011 = vmatpush1.msra.mxu0 0.0
  %1012 = vmatprep.subr.mxu0 0.0
  %1013 = vmatpush1.msra.mxu0 0.0
  %1014 = vmatprep.subr.mxu0 0.0
  %1015 = vmatpush1.msra.mxu0 0.0
  %1016 = vmatprep.subr.mxu0 0.0
  %1017 = vmatpush1.msra.mxu0 0.0
  %1018 = vmatprep.mubr.f32.mxu0 0.0
  %1019 = vmatmul.mubr.f32.gmra.mrb[0].mxu0 %v951
  %v1020 = vpop.f32.mrb[0].mxu0
  %v1021 = vadd.f32 0.0, %v1020
  %v1022 = vpop.f32.mrb[0].mxu0
  %1023 = vdwg.mxu0
  %v1024 = vadd.f32 %v953, %v1021
  %v1025 = vtanh.pop %v1024
  %vm1026 = vcmp.eq.s32.totalorder %v115, 4
  %v1027 = vsel %vm1026, %v113, 0.0
  %v1028 = vsel %vm120, %v1027, 0.0
  %1029 = vadd.xlane.f32.xlu0 %v1028
  %v1030 = vpop.xlane.xlu0 %1029
  %v1031 = vmul.f32 %v1030, %v128
  %v1032 = vmul.f32 %v1030, %v132
  %1033 = vmatprep.subr.mxu0 %v66
  %1034 = vmatpush1.msra.mxu0 %v65
  %1035 = vmatprep.subr.mxu0 %v68
  %1036 = vmatpush1.msra.mxu0 %v67
  %1037 = vmatprep.subr.mxu0 %v70
  %1038 = vmatpush1.msra.mxu0 %v69
  %1039 = vmatprep.subr.mxu0 %v72
  %1040 = vmatpush1.msra.mxu0 %v71
  %1041 = vmatprep.subr.mxu0 %v74
  %1042 = vmatpush1.msra.mxu0 %v73
  %1043 = vmatprep.subr.mxu0 %v76
  %1044 = vmatpush1.msra.mxu0 %v75
  %1045 = vmatprep.subr.mxu0 %v78
  %1046 = vmatpush1.msra.mxu0 %v77
  %1047 = vmatprep.subr.mxu0 %v80
  %1048 = vmatpush1.msra.mxu0 %v79
  %1049 = vmatprep.subr.mxu0 %v82
  %1050 = vmatpush1.msra.mxu0 %v81
  %1051 = vmatprep.subr.mxu0 %v84
  %1052 = vmatpush1.msra.mxu0 %v83
  %1053 = vmatprep.subr.mxu0 %v86
  %1054 = vmatpush1.msra.mxu0 %v85
  %1055 = vmatprep.subr.mxu0 %v88
  %1056 = vmatpush1.msra.mxu0 %v87
  %1057 = vmatprep.subr.mxu0 %v90
  %1058 = vmatpush1.msra.mxu0 %v89
  %1059 = vmatprep.subr.mxu0 %v92
  %1060 = vmatpush1.msra.mxu0 %v91
  %1061 = vmatprep.subr.mxu0 %v94
  %1062 = vmatpush1.msra.mxu0 %v93
  %1063 = vmatprep.subr.mxu0 %v96
  %1064 = vmatpush1.msra.mxu0 %v95
  %1065 = vmatprep.subr.mxu0 0.0
  %1066 = vmatpush1.msra.mxu0 0.0
  %1067 = vmatprep.subr.mxu0 0.0
  %1068 = vmatpush1.msra.mxu0 0.0
  %1069 = vmatprep.subr.mxu0 0.0
  %1070 = vmatpush1.msra.mxu0 0.0
  %1071 = vmatprep.subr.mxu0 0.0
  %1072 = vmatpush1.msra.mxu0 0.0
  %1073 = vmatprep.subr.mxu0 0.0
  %1074 = vmatpush1.msra.mxu0 0.0
  %1075 = vmatprep.subr.mxu0 0.0
  %1076 = vmatpush1.msra.mxu0 0.0
  %1077 = vmatprep.subr.mxu0 0.0
  %1078 = vmatpush1.msra.mxu0 0.0
  %1079 = vmatprep.subr.mxu0 0.0
  %1080 = vmatpush1.msra.mxu0 0.0
  %1081 = vmatprep.subr.mxu0 0.0
  %1082 = vmatpush1.msra.mxu0 0.0
  %1083 = vmatprep.subr.mxu0 0.0
  %1084 = vmatpush1.msra.mxu0 0.0
  %1085 = vmatprep.subr.mxu0 0.0
  %1086 = vmatpush1.msra.mxu0 0.0
  %1087 = vmatprep.subr.mxu0 0.0
  %1088 = vmatpush1.msra.mxu0 0.0
  %1089 = vmatprep.subr.mxu0 0.0
  %1090 = vmatpush1.msra.mxu0 0.0
  %1091 = vmatprep.subr.mxu0 0.0
  %1092 = vmatpush1.msra.mxu0 0.0
  %1093 = vmatprep.subr.mxu0 0.0
  %1094 = vmatpush1.msra.mxu0 0.0
  %1095 = vmatprep.subr.mxu0 0.0
  %1096 = vmatpush1.msra.mxu0 0.0
  %1097 = vmatprep.mubr.f32.mxu0 0.0
  %1098 = vmatmul.mubr.f32.gmra.mrb[0].mxu0 %v952
  %v1099 = vpop.f32.mrb[0].mxu0
  %v1100 = vadd.f32 0.0, %v1099
  %v1101 = vpop.f32.mrb[0].mxu0
  %v1102 = vadd.f32 0.0, %v1101
  %1103 = vdwg.mxu0
  %1104 = vmatprep.subr.mxu0 %v34
  %1105 = vmatpush1.msra.mxu0 %v33
  %1106 = vmatprep.subr.mxu0 %v36
  %1107 = vmatpush1.msra.mxu0 %v35
  %1108 = vmatprep.subr.mxu0 %v38
  %1109 = vmatpush1.msra.mxu0 %v37
  %1110 = vmatprep.subr.mxu0 %v40
  %1111 = vmatpush1.msra.mxu0 %v39
  %1112 = vmatprep.subr.mxu0 %v42
  %1113 = vmatpush1.msra.mxu0 %v41
  %1114 = vmatprep.subr.mxu0 %v44
  %1115 = vmatpush1.msra.mxu0 %v43
  %1116 = vmatprep.subr.mxu0 %v46
  %1117 = vmatpush1.msra.mxu0 %v45
  %1118 = vmatprep.subr.mxu0 %v48
  %1119 = vmatpush1.msra.mxu0 %v47
  %1120 = vmatprep.subr.mxu0 %v50
  %1121 = vmatpush1.msra.mxu0 %v49
  %1122 = vmatprep.subr.mxu0 %v52
  %1123 = vmatpush1.msra.mxu0 %v51
  %1124 = vmatprep.subr.mxu0 %v54
  %1125 = vmatpush1.msra.mxu0 %v53
  %1126 = vmatprep.subr.mxu0 %v56
  %1127 = vmatpush1.msra.mxu0 %v55
  %1128 = vmatprep.subr.mxu0 %v58
  %1129 = vmatpush1.msra.mxu0 %v57
  %1130 = vmatprep.subr.mxu0 %v60
  %1131 = vmatpush1.msra.mxu0 %v59
  %1132 = vmatprep.subr.mxu0 %v62
  %1133 = vmatpush1.msra.mxu0 %v61
  %1134 = vmatprep.subr.mxu0 %v64
  %1135 = vmatpush1.msra.mxu0 %v63
  %1136 = vmatprep.subr.mxu0 0.0
  %1137 = vmatpush1.msra.mxu0 0.0
  %1138 = vmatprep.subr.mxu0 0.0
  %1139 = vmatpush1.msra.mxu0 0.0
  %1140 = vmatprep.subr.mxu0 0.0
  %1141 = vmatpush1.msra.mxu0 0.0
  %1142 = vmatprep.subr.mxu0 0.0
  %1143 = vmatpush1.msra.mxu0 0.0
  %1144 = vmatprep.subr.mxu0 0.0
  %1145 = vmatpush1.msra.mxu0 0.0
  %1146 = vmatprep.subr.mxu0 0.0
  %1147 = vmatpush1.msra.mxu0 0.0
  %1148 = vmatprep.subr.mxu0 0.0
  %1149 = vmatpush1.msra.mxu0 0.0
  %1150 = vmatprep.subr.mxu0 0.0
  %1151 = vmatpush1.msra.mxu0 0.0
  %1152 = vmatprep.subr.mxu0 0.0
  %1153 = vmatpush1.msra.mxu0 0.0
  %1154 = vmatprep.subr.mxu0 0.0
  %1155 = vmatpush1.msra.mxu0 0.0
  %1156 = vmatprep.subr.mxu0 0.0
  %1157 = vmatpush1.msra.mxu0 0.0
  %1158 = vmatprep.subr.mxu0 0.0
  %1159 = vmatpush1.msra.mxu0 0.0
  %1160 = vmatprep.subr.mxu0 0.0
  %1161 = vmatpush1.msra.mxu0 0.0
  %1162 = vmatprep.subr.mxu0 0.0
  %1163 = vmatpush1.msra.mxu0 0.0
  %1164 = vmatprep.subr.mxu0 0.0
  %1165 = vmatpush1.msra.mxu0 0.0
  %1166 = vmatprep.subr.mxu0 0.0
  %1167 = vmatpush1.msra.mxu0 0.0
  %1168 = vmatprep.mubr.f32.mxu0 0.0
  %1169 = vmatmul.mubr.f32.gmra.mrb[0].mxu0 %v1025
  %v1170 = vpop.f32.mrb[0].mxu0
  %v1171 = vadd.f32 %v1100, %v1170
  %v1172 = vpop.f32.mrb[0].mxu0
  %v1173 = vadd.f32 %v1102, %v1172
  %1174 = vdwg.mxu0
  %v1175 = vadd.f32 %v1173, %v1032
  %v1176 = vadd.f32 %v952, %v1175
  %v1177 = vadd.f32 %v1171, %v1031
  %1178 = vmatprep.subr.mxu0 0.0
  %1179 = vmatpush1.msra.mxu0 %v97
  %1180 = vmatprep.subr.mxu0 0.0
  %1181 = vmatpush1.msra.mxu0 %v98
  %1182 = vmatprep.subr.mxu0 0.0
  %1183 = vmatpush1.msra.mxu0 %v99
  %1184 = vmatprep.subr.mxu0 0.0
  %1185 = vmatpush1.msra.mxu0 %v100
  %1186 = vmatprep.subr.mxu0 0.0
  %1187 = vmatpush1.msra.mxu0 %v101
  %1188 = vmatprep.subr.mxu0 0.0
  %1189 = vmatpush1.msra.mxu0 %v102
  %1190 = vmatprep.subr.mxu0 0.0
  %1191 = vmatpush1.msra.mxu0 %v103
  %1192 = vmatprep.subr.mxu0 0.0
  %1193 = vmatpush1.msra.mxu0 %v104
  %1194 = vmatprep.subr.mxu0 0.0
  %1195 = vmatpush1.msra.mxu0 %v105
  %1196 = vmatprep.subr.mxu0 0.0
  %1197 = vmatpush1.msra.mxu0 %v106
  %1198 = vmatprep.subr.mxu0 0.0
  %1199 = vmatpush1.msra.mxu0 %v107
  %1200 = vmatprep.subr.mxu0 0.0
  %1201 = vmatpush1.msra.mxu0 %v108
  %1202 = vmatprep.subr.mxu0 0.0
  %1203 = vmatpush1.msra.mxu0 %v109
  %1204 = vmatprep.subr.mxu0 0.0
  %1205 = vmatpush1.msra.mxu0 %v110
  %1206 = vmatprep.subr.mxu0 0.0
  %1207 = vmatpush1.msra.mxu0 %v111
  %1208 = vmatprep.subr.mxu0 0.0
  %1209 = vmatpush1.msra.mxu0 %v112
  %1210 = vmatprep.subr.mxu0 0.0
  %1211 = vmatpush1.msra.mxu0 0.0
  %1212 = vmatprep.subr.mxu0 0.0
  %1213 = vmatpush1.msra.mxu0 0.0
  %1214 = vmatprep.subr.mxu0 0.0
  %1215 = vmatpush1.msra.mxu0 0.0
  %1216 = vmatprep.subr.mxu0 0.0
  %1217 = vmatpush1.msra.mxu0 0.0
  %1218 = vmatprep.subr.mxu0 0.0
  %1219 = vmatpush1.msra.mxu0 0.0
  %1220 = vmatprep.subr.mxu0 0.0
  %1221 = vmatpush1.msra.mxu0 0.0
  %1222 = vmatprep.subr.mxu0 0.0
  %1223 = vmatpush1.msra.mxu0 0.0
  %1224 = vmatprep.subr.mxu0 0.0
  %1225 = vmatpush1.msra.mxu0 0.0
  %1226 = vmatprep.subr.mxu0 0.0
  %1227 = vmatpush1.msra.mxu0 0.0
  %1228 = vmatprep.subr.mxu0 0.0
  %1229 = vmatpush1.msra.mxu0 0.0
  %1230 = vmatprep.subr.mxu0 0.0
  %1231 = vmatpush1.msra.mxu0 0.0
  %1232 = vmatprep.subr.mxu0 0.0
  %1233 = vmatpush1.msra.mxu0 0.0
  %1234 = vmatprep.subr.mxu0 0.0
  %1235 = vmatpush1.msra.mxu0 0.0
  %1236 = vmatprep.subr.mxu0 0.0
  %1237 = vmatpush1.msra.mxu0 0.0
  %1238 = vmatprep.subr.mxu0 0.0
  %1239 = vmatpush1.msra.mxu0 0.0
  %1240 = vmatprep.subr.mxu0 0.0
  %1241 = vmatpush1.msra.mxu0 0.0
  %1242 = vmatprep.mubr.f32.mxu0 0.0
  %1243 = vmatmul.mubr.f32.gmra.mrb[0].mxu0 %v1175
  %v1244 = vpop.f32.mrb[0].mxu0
  %v1245 = vadd.f32 0.0, %v1244
  %v1246 = vpop.f32.mrb[0].mxu0
  %1247 = vdwg.mxu0
  %v1248 = vadd.f32 %v1177, %v1245
  %v1249 = vtanh.pop %v1248
  %vm1250 = vcmp.eq.s32.totalorder %v115, 5
  %v1251 = vsel %vm1250, %v113, 0.0
  %v1252 = vsel %vm120, %v1251, 0.0
  %1253 = vadd.xlane.f32.xlu0 %v1252
  %v1254 = vpop.xlane.xlu0 %1253
  %v1255 = vmul.f32 %v1254, %v128
  %v1256 = vmul.f32 %v1254, %v132
  %1257 = vmatprep.subr.mxu0 %v66
  %1258 = vmatpush1.msra.mxu0 %v65
  %1259 = vmatprep.subr.mxu0 %v68
  %1260 = vmatpush1.msra.mxu0 %v67
  %1261 = vmatprep.subr.mxu0 %v70
  %1262 = vmatpush1.msra.mxu0 %v69
  %1263 = vmatprep.subr.mxu0 %v72
  %1264 = vmatpush1.msra.mxu0 %v71
  %1265 = vmatprep.subr.mxu0 %v74
  %1266 = vmatpush1.msra.mxu0 %v73
  %1267 = vmatprep.subr.mxu0 %v76
  %1268 = vmatpush1.msra.mxu0 %v75
  %1269 = vmatprep.subr.mxu0 %v78
  %1270 = vmatpush1.msra.mxu0 %v77
  %1271 = vmatprep.subr.mxu0 %v80
  %1272 = vmatpush1.msra.mxu0 %v79
  %1273 = vmatprep.subr.mxu0 %v82
  %1274 = vmatpush1.msra.mxu0 %v81
  %1275 = vmatprep.subr.mxu0 %v84
  %1276 = vmatpush1.msra.mxu0 %v83
  %1277 = vmatprep.subr.mxu0 %v86
  %1278 = vmatpush1.msra.mxu0 %v85
  %1279 = vmatprep.subr.mxu0 %v88
  %1280 = vmatpush1.msra.mxu0 %v87
  %1281 = vmatprep.subr.mxu0 %v90
  %1282 = vmatpush1.msra.mxu0 %v89
  %1283 = vmatprep.subr.mxu0 %v92
  %1284 = vmatpush1.msra.mxu0 %v91
  %1285 = vmatprep.subr.mxu0 %v94
  %1286 = vmatpush1.msra.mxu0 %v93
  %1287 = vmatprep.subr.mxu0 %v96
  %1288 = vmatpush1.msra.mxu0 %v95
  %1289 = vmatprep.subr.mxu0 0.0
  %1290 = vmatpush1.msra.mxu0 0.0
  %1291 = vmatprep.subr.mxu0 0.0
  %1292 = vmatpush1.msra.mxu0 0.0
  %1293 = vmatprep.subr.mxu0 0.0
  %1294 = vmatpush1.msra.mxu0 0.0
  %1295 = vmatprep.subr.mxu0 0.0
  %1296 = vmatpush1.msra.mxu0 0.0
  %1297 = vmatprep.subr.mxu0 0.0
  %1298 = vmatpush1.msra.mxu0 0.0
  %1299 = vmatprep.subr.mxu0 0.0
  %1300 = vmatpush1.msra.mxu0 0.0
  %1301 = vmatprep.subr.mxu0 0.0
  %1302 = vmatpush1.msra.mxu0 0.0
  %1303 = vmatprep.subr.mxu0 0.0
  %1304 = vmatpush1.msra.mxu0 0.0
  %1305 = vmatprep.subr.mxu0 0.0
  %1306 = vmatpush1.msra.mxu0 0.0
  %1307 = vmatprep.subr.mxu0 0.0
  %1308 = vmatpush1.msra.mxu0 0.0
  %1309 = vmatprep.subr.mxu0 0.0
  %1310 = vmatpush1.msra.mxu0 0.0
  %1311 = vmatprep.subr.mxu0 0.0
  %1312 = vmatpush1.msra.mxu0 0.0
  %1313 = vmatprep.subr.mxu0 0.0
  %1314 = vmatpush1.msra.mxu0 0.0
  %1315 = vmatprep.subr.mxu0 0.0
  %1316 = vmatpush1.msra.mxu0 0.0
  %1317 = vmatprep.subr.mxu0 0.0
  %1318 = vmatpush1.msra.mxu0 0.0
  %1319 = vmatprep.subr.mxu0 0.0
  %1320 = vmatpush1.msra.mxu0 0.0
  %1321 = vmatprep.mubr.f32.mxu0 0.0
  %1322 = vmatmul.mubr.f32.gmra.mrb[0].mxu0 %v1176
  %v1323 = vpop.f32.mrb[0].mxu0
  %v1324 = vadd.f32 0.0, %v1323
  %v1325 = vpop.f32.mrb[0].mxu0
  %v1326 = vadd.f32 0.0, %v1325
  %1327 = vdwg.mxu0
  %1328 = vmatprep.subr.mxu0 %v34
  %1329 = vmatpush1.msra.mxu0 %v33
  %1330 = vmatprep.subr.mxu0 %v36
  %1331 = vmatpush1.msra.mxu0 %v35
  %1332 = vmatprep.subr.mxu0 %v38
  %1333 = vmatpush1.msra.mxu0 %v37
  %1334 = vmatprep.subr.mxu0 %v40
  %1335 = vmatpush1.msra.mxu0 %v39
  %1336 = vmatprep.subr.mxu0 %v42
  %1337 = vmatpush1.msra.mxu0 %v41
  %1338 = vmatprep.subr.mxu0 %v44
  %1339 = vmatpush1.msra.mxu0 %v43
  %1340 = vmatprep.subr.mxu0 %v46
  %1341 = vmatpush1.msra.mxu0 %v45
  %1342 = vmatprep.subr.mxu0 %v48
  %1343 = vmatpush1.msra.mxu0 %v47
  %1344 = vmatprep.subr.mxu0 %v50
  %1345 = vmatpush1.msra.mxu0 %v49
  %1346 = vmatprep.subr.mxu0 %v52
  %1347 = vmatpush1.msra.mxu0 %v51
  %1348 = vmatprep.subr.mxu0 %v54
  %1349 = vmatpush1.msra.mxu0 %v53
  %1350 = vmatprep.subr.mxu0 %v56
  %1351 = vmatpush1.msra.mxu0 %v55
  %1352 = vmatprep.subr.mxu0 %v58
  %1353 = vmatpush1.msra.mxu0 %v57
  %1354 = vmatprep.subr.mxu0 %v60
  %1355 = vmatpush1.msra.mxu0 %v59
  %1356 = vmatprep.subr.mxu0 %v62
  %1357 = vmatpush1.msra.mxu0 %v61
  %1358 = vmatprep.subr.mxu0 %v64
  %1359 = vmatpush1.msra.mxu0 %v63
  %1360 = vmatprep.subr.mxu0 0.0
  %1361 = vmatpush1.msra.mxu0 0.0
  %1362 = vmatprep.subr.mxu0 0.0
  %1363 = vmatpush1.msra.mxu0 0.0
  %1364 = vmatprep.subr.mxu0 0.0
  %1365 = vmatpush1.msra.mxu0 0.0
  %1366 = vmatprep.subr.mxu0 0.0
  %1367 = vmatpush1.msra.mxu0 0.0
  %1368 = vmatprep.subr.mxu0 0.0
  %1369 = vmatpush1.msra.mxu0 0.0
  %1370 = vmatprep.subr.mxu0 0.0
  %1371 = vmatpush1.msra.mxu0 0.0
  %1372 = vmatprep.subr.mxu0 0.0
  %1373 = vmatpush1.msra.mxu0 0.0
  %1374 = vmatprep.subr.mxu0 0.0
  %1375 = vmatpush1.msra.mxu0 0.0
  %1376 = vmatprep.subr.mxu0 0.0
  %1377 = vmatpush1.msra.mxu0 0.0
  %1378 = vmatprep.subr.mxu0 0.0
  %1379 = vmatpush1.msra.mxu0 0.0
  %1380 = vmatprep.subr.mxu0 0.0
  %1381 = vmatpush1.msra.mxu0 0.0
  %1382 = vmatprep.subr.mxu0 0.0
  %1383 = vmatpush1.msra.mxu0 0.0
  %1384 = vmatprep.subr.mxu0 0.0
  %1385 = vmatpush1.msra.mxu0 0.0
  %1386 = vmatprep.subr.mxu0 0.0
  %1387 = vmatpush1.msra.mxu0 0.0
  %1388 = vmatprep.subr.mxu0 0.0
  %1389 = vmatpush1.msra.mxu0 0.0
  %1390 = vmatprep.subr.mxu0 0.0
  %1391 = vmatpush1.msra.mxu0 0.0
  %1392 = vmatprep.mubr.f32.mxu0 0.0
  %1393 = vmatmul.mubr.f32.gmra.mrb[0].mxu0 %v1249
  %v1394 = vpop.f32.mrb[0].mxu0
  %v1395 = vadd.f32 %v1324, %v1394
  %v1396 = vpop.f32.mrb[0].mxu0
  %v1397 = vadd.f32 %v1326, %v1396
  %1398 = vdwg.mxu0
  %v1399 = vadd.f32 %v1397, %v1256
  %v1400 = vadd.f32 %v1176, %v1399
  %v1401 = vadd.f32 %v1395, %v1255
  %1402 = vmatprep.subr.mxu0 0.0
  %1403 = vmatpush1.msra.mxu0 %v97
  %1404 = vmatprep.subr.mxu0 0.0
  %1405 = vmatpush1.msra.mxu0 %v98
  %1406 = vmatprep.subr.mxu0 0.0
  %1407 = vmatpush1.msra.mxu0 %v99
  %1408 = vmatprep.subr.mxu0 0.0
  %1409 = vmatpush1.msra.mxu0 %v100
  %1410 = vmatprep.subr.mxu0 0.0
  %1411 = vmatpush1.msra.mxu0 %v101
  %1412 = vmatprep.subr.mxu0 0.0
  %1413 = vmatpush1.msra.mxu0 %v102
  %1414 = vmatprep.subr.mxu0 0.0
  %1415 = vmatpush1.msra.mxu0 %v103
  %1416 = vmatprep.subr.mxu0 0.0
  %1417 = vmatpush1.msra.mxu0 %v104
  %1418 = vmatprep.subr.mxu0 0.0
  %1419 = vmatpush1.msra.mxu0 %v105
  %1420 = vmatprep.subr.mxu0 0.0
  %1421 = vmatpush1.msra.mxu0 %v106
  %1422 = vmatprep.subr.mxu0 0.0
  %1423 = vmatpush1.msra.mxu0 %v107
  %1424 = vmatprep.subr.mxu0 0.0
  %1425 = vmatpush1.msra.mxu0 %v108
  %1426 = vmatprep.subr.mxu0 0.0
  %1427 = vmatpush1.msra.mxu0 %v109
  %1428 = vmatprep.subr.mxu0 0.0
  %1429 = vmatpush1.msra.mxu0 %v110
  %1430 = vmatprep.subr.mxu0 0.0
  %1431 = vmatpush1.msra.mxu0 %v111
  %1432 = vmatprep.subr.mxu0 0.0
  %1433 = vmatpush1.msra.mxu0 %v112
  %1434 = vmatprep.subr.mxu0 0.0
  %1435 = vmatpush1.msra.mxu0 0.0
  %1436 = vmatprep.subr.mxu0 0.0
  %1437 = vmatpush1.msra.mxu0 0.0
  %1438 = vmatprep.subr.mxu0 0.0
  %1439 = vmatpush1.msra.mxu0 0.0
  %1440 = vmatprep.subr.mxu0 0.0
  %1441 = vmatpush1.msra.mxu0 0.0
  %1442 = vmatprep.subr.mxu0 0.0
  %1443 = vmatpush1.msra.mxu0 0.0
  %1444 = vmatprep.subr.mxu0 0.0
  %1445 = vmatpush1.msra.mxu0 0.0
  %1446 = vmatprep.subr.mxu0 0.0
  %1447 = vmatpush1.msra.mxu0 0.0
  %1448 = vmatprep.subr.mxu0 0.0
  %1449 = vmatpush1.msra.mxu0 0.0
  %1450 = vmatprep.subr.mxu0 0.0
  %1451 = vmatpush1.msra.mxu0 0.0
  %1452 = vmatprep.subr.mxu0 0.0
  %1453 = vmatpush1.msra.mxu0 0.0
  %1454 = vmatprep.subr.mxu0 0.0
  %1455 = vmatpush1.msra.mxu0 0.0
  %1456 = vmatprep.subr.mxu0 0.0
  %1457 = vmatpush1.msra.mxu0 0.0
  %1458 = vmatprep.subr.mxu0 0.0
  %1459 = vmatpush1.msra.mxu0 0.0
  %1460 = vmatprep.subr.mxu0 0.0
  %1461 = vmatpush1.msra.mxu0 0.0
  %1462 = vmatprep.subr.mxu0 0.0
  %1463 = vmatpush1.msra.mxu0 0.0
  %1464 = vmatprep.subr.mxu0 0.0
  %1465 = vmatpush1.msra.mxu0 0.0
  %1466 = vmatprep.mubr.f32.mxu0 0.0
  %1467 = vmatmul.mubr.f32.gmra.mrb[0].mxu0 %v1399
  %v1468 = vpop.f32.mrb[0].mxu0
  %v1469 = vadd.f32 0.0, %v1468
  %v1470 = vpop.f32.mrb[0].mxu0
  %1471 = vdwg.mxu0
  %v1472 = vadd.f32 %v1401, %v1469
  %v1473 = vtanh.pop %v1472
  %vm1474 = vcmp.eq.s32.totalorder %v115, 6
  %v1475 = vsel %vm1474, %v113, 0.0
  %v1476 = vsel %vm120, %v1475, 0.0
  %1477 = vadd.xlane.f32.xlu0 %v1476
  %v1478 = vpop.xlane.xlu0 %1477
  %v1479 = vmul.f32 %v1478, %v128
  %v1480 = vmul.f32 %v1478, %v132
  %1481 = vmatprep.subr.mxu0 %v66
  %1482 = vmatpush1.msra.mxu0 %v65
  %1483 = vmatprep.subr.mxu0 %v68
  %1484 = vmatpush1.msra.mxu0 %v67
  %1485 = vmatprep.subr.mxu0 %v70
  %1486 = vmatpush1.msra.mxu0 %v69
  %1487 = vmatprep.subr.mxu0 %v72
  %1488 = vmatpush1.msra.mxu0 %v71
  %1489 = vmatprep.subr.mxu0 %v74
  %1490 = vmatpush1.msra.mxu0 %v73
  %1491 = vmatprep.subr.mxu0 %v76
  %1492 = vmatpush1.msra.mxu0 %v75
  %1493 = vmatprep.subr.mxu0 %v78
  %1494 = vmatpush1.msra.mxu0 %v77
  %1495 = vmatprep.subr.mxu0 %v80
  %1496 = vmatpush1.msra.mxu0 %v79
  %1497 = vmatprep.subr.mxu0 %v82
  %1498 = vmatpush1.msra.mxu0 %v81
  %1499 = vmatprep.subr.mxu0 %v84
  %1500 = vmatpush1.msra.mxu0 %v83
  %1501 = vmatprep.subr.mxu0 %v86
  %1502 = vmatpush1.msra.mxu0 %v85
  %1503 = vmatprep.subr.mxu0 %v88
  %1504 = vmatpush1.msra.mxu0 %v87
  %1505 = vmatprep.subr.mxu0 %v90
  %1506 = vmatpush1.msra.mxu0 %v89
  %1507 = vmatprep.subr.mxu0 %v92
  %1508 = vmatpush1.msra.mxu0 %v91
  %1509 = vmatprep.subr.mxu0 %v94
  %1510 = vmatpush1.msra.mxu0 %v93
  %1511 = vmatprep.subr.mxu0 %v96
  %1512 = vmatpush1.msra.mxu0 %v95
  %1513 = vmatprep.subr.mxu0 0.0
  %1514 = vmatpush1.msra.mxu0 0.0
  %1515 = vmatprep.subr.mxu0 0.0
  %1516 = vmatpush1.msra.mxu0 0.0
  %1517 = vmatprep.subr.mxu0 0.0
  %1518 = vmatpush1.msra.mxu0 0.0
  %1519 = vmatprep.subr.mxu0 0.0
  %1520 = vmatpush1.msra.mxu0 0.0
  %1521 = vmatprep.subr.mxu0 0.0
  %1522 = vmatpush1.msra.mxu0 0.0
  %1523 = vmatprep.subr.mxu0 0.0
  %1524 = vmatpush1.msra.mxu0 0.0
  %1525 = vmatprep.subr.mxu0 0.0
  %1526 = vmatpush1.msra.mxu0 0.0
  %1527 = vmatprep.subr.mxu0 0.0
  %1528 = vmatpush1.msra.mxu0 0.0
  %1529 = vmatprep.subr.mxu0 0.0
  %1530 = vmatpush1.msra.mxu0 0.0
  %1531 = vmatprep.subr.mxu0 0.0
  %1532 = vmatpush1.msra.mxu0 0.0
  %1533 = vmatprep.subr.mxu0 0.0
  %1534 = vmatpush1.msra.mxu0 0.0
  %1535 = vmatprep.subr.mxu0 0.0
  %1536 = vmatpush1.msra.mxu0 0.0
  %1537 = vmatprep.subr.mxu0 0.0
  %1538 = vmatpush1.msra.mxu0 0.0
  %1539 = vmatprep.subr.mxu0 0.0
  %1540 = vmatpush1.msra.mxu0 0.0
  %1541 = vmatprep.subr.mxu0 0.0
  %1542 = vmatpush1.msra.mxu0 0.0
  %1543 = vmatprep.subr.mxu0 0.0
  %1544 = vmatpush1.msra.mxu0 0.0
  %1545 = vmatprep.mubr.f32.mxu0 0.0
  %1546 = vmatmul.mubr.f32.gmra.mrb[0].mxu0 %v1400
  %v1547 = vpop.f32.mrb[0].mxu0
  %v1548 = vadd.f32 0.0, %v1547
  %v1549 = vpop.f32.mrb[0].mxu0
  %v1550 = vadd.f32 0.0, %v1549
  %1551 = vdwg.mxu0
  %1552 = vmatprep.subr.mxu0 %v34
  %1553 = vmatpush1.msra.mxu0 %v33
  %1554 = vmatprep.subr.mxu0 %v36
  %1555 = vmatpush1.msra.mxu0 %v35
  %1556 = vmatprep.subr.mxu0 %v38
  %1557 = vmatpush1.msra.mxu0 %v37
  %1558 = vmatprep.subr.mxu0 %v40
  %1559 = vmatpush1.msra.mxu0 %v39
  %1560 = vmatprep.subr.mxu0 %v42
  %1561 = vmatpush1.msra.mxu0 %v41
  %1562 = vmatprep.subr.mxu0 %v44
  %1563 = vmatpush1.msra.mxu0 %v43
  %1564 = vmatprep.subr.mxu0 %v46
  %1565 = vmatpush1.msra.mxu0 %v45
  %1566 = vmatprep.subr.mxu0 %v48
  %1567 = vmatpush1.msra.mxu0 %v47
  %1568 = vmatprep.subr.mxu0 %v50
  %1569 = vmatpush1.msra.mxu0 %v49
  %1570 = vmatprep.subr.mxu0 %v52
  %1571 = vmatpush1.msra.mxu0 %v51
  %1572 = vmatprep.subr.mxu0 %v54
  %1573 = vmatpush1.msra.mxu0 %v53
  %1574 = vmatprep.subr.mxu0 %v56
  %1575 = vmatpush1.msra.mxu0 %v55
  %1576 = vmatprep.subr.mxu0 %v58
  %1577 = vmatpush1.msra.mxu0 %v57
  %1578 = vmatprep.subr.mxu0 %v60
  %1579 = vmatpush1.msra.mxu0 %v59
  %1580 = vmatprep.subr.mxu0 %v62
  %1581 = vmatpush1.msra.mxu0 %v61
  %1582 = vmatprep.subr.mxu0 %v64
  %1583 = vmatpush1.msra.mxu0 %v63
  %1584 = vmatprep.subr.mxu0 0.0
  %1585 = vmatpush1.msra.mxu0 0.0
  %1586 = vmatprep.subr.mxu0 0.0
  %1587 = vmatpush1.msra.mxu0 0.0
  %1588 = vmatprep.subr.mxu0 0.0
  %1589 = vmatpush1.msra.mxu0 0.0
  %1590 = vmatprep.subr.mxu0 0.0
  %1591 = vmatpush1.msra.mxu0 0.0
  %1592 = vmatprep.subr.mxu0 0.0
  %1593 = vmatpush1.msra.mxu0 0.0
  %1594 = vmatprep.subr.mxu0 0.0
  %1595 = vmatpush1.msra.mxu0 0.0
  %1596 = vmatprep.subr.mxu0 0.0
  %1597 = vmatpush1.msra.mxu0 0.0
  %1598 = vmatprep.subr.mxu0 0.0
  %1599 = vmatpush1.msra.mxu0 0.0
  %1600 = vmatprep.subr.mxu0 0.0
  %1601 = vmatpush1.msra.mxu0 0.0
  %1602 = vmatprep.subr.mxu0 0.0
  %1603 = vmatpush1.msra.mxu0 0.0
  %1604 = vmatprep.subr.mxu0 0.0
  %1605 = vmatpush1.msra.mxu0 0.0
  %1606 = vmatprep.subr.mxu0 0.0
  %1607 = vmatpush1.msra.mxu0 0.0
  %1608 = vmatprep.subr.mxu0 0.0
  %1609 = vmatpush1.msra.mxu0 0.0
  %1610 = vmatprep.subr.mxu0 0.0
  %1611 = vmatpush1.msra.mxu0 0.0
  %1612 = vmatprep.subr.mxu0 0.0
  %1613 = vmatpush1.msra.mxu0 0.0
  %1614 = vmatprep.subr.mxu0 0.0
  %1615 = vmatpush1.msra.mxu0 0.0
  %1616 = vmatprep.mubr.f32.mxu0 0.0
  %1617 = vmatmul.mubr.f32.gmra.mrb[0].mxu0 %v1473
  %v1618 = vpop.f32.mrb[0].mxu0
  %v1619 = vadd.f32 %v1548, %v1618
  %v1620 = vpop.f32.mrb[0].mxu0
  %v1621 = vadd.f32 %v1550, %v1620
  %1622 = vdwg.mxu0
  %v1623 = vadd.f32 %v1621, %v1480
  %v1624 = vadd.f32 %v1400, %v1623
  %v1625 = vadd.f32 %v1619, %v1479
  %1626 = vmatprep.subr.mxu0 0.0
  %1627 = vmatpush1.msra.mxu0 %v97
  %1628 = vmatprep.subr.mxu0 0.0
  %1629 = vmatpush1.msra.mxu0 %v98
  %1630 = vmatprep.subr.mxu0 0.0
  %1631 = vmatpush1.msra.mxu0 %v99
  %1632 = vmatprep.subr.mxu0 0.0
  %1633 = vmatpush1.msra.mxu0 %v100
  %1634 = vmatprep.subr.mxu0 0.0
  %1635 = vmatpush1.msra.mxu0 %v101
  %1636 = vmatprep.subr.mxu0 0.0
  %1637 = vmatpush1.msra.mxu0 %v102
  %1638 = vmatprep.subr.mxu0 0.0
  %1639 = vmatpush1.msra.mxu0 %v103
  %1640 = vmatprep.subr.mxu0 0.0
  %1641 = vmatpush1.msra.mxu0 %v104
  %1642 = vmatprep.subr.mxu0 0.0
  %1643 = vmatpush1.msra.mxu0 %v105
  %1644 = vmatprep.subr.mxu0 0.0
  %1645 = vmatpush1.msra.mxu0 %v106
  %1646 = vmatprep.subr.mxu0 0.0
  %1647 = vmatpush1.msra.mxu0 %v107
  %1648 = vmatprep.subr.mxu0 0.0
  %1649 = vmatpush1.msra.mxu0 %v108
  %1650 = vmatprep.subr.mxu0 0.0
  %1651 = vmatpush1.msra.mxu0 %v109
  %1652 = vmatprep.subr.mxu0 0.0
  %1653 = vmatpush1.msra.mxu0 %v110
  %1654 = vmatprep.subr.mxu0 0.0
  %1655 = vmatpush1.msra.mxu0 %v111
  %1656 = vmatprep.subr.mxu0 0.0
  %1657 = vmatpush1.msra.mxu0 %v112
  %1658 = vmatprep.subr.mxu0 0.0
  %1659 = vmatpush1.msra.mxu0 0.0
  %1660 = vmatprep.subr.mxu0 0.0
  %1661 = vmatpush1.msra.mxu0 0.0
  %1662 = vmatprep.subr.mxu0 0.0
  %1663 = vmatpush1.msra.mxu0 0.0
  %1664 = vmatprep.subr.mxu0 0.0
  %1665 = vmatpush1.msra.mxu0 0.0
  %1666 = vmatprep.subr.mxu0 0.0
  %1667 = vmatpush1.msra.mxu0 0.0
  %1668 = vmatprep.subr.mxu0 0.0
  %1669 = vmatpush1.msra.mxu0 0.0
  %1670 = vmatprep.subr.mxu0 0.0
  %1671 = vmatpush1.msra.mxu0 0.0
  %1672 = vmatprep.subr.mxu0 0.0
  %1673 = vmatpush1.msra.mxu0 0.0
  %1674 = vmatprep.subr.mxu0 0.0
  %1675 = vmatpush1.msra.mxu0 0.0
  %1676 = vmatprep.subr.mxu0 0.0
  %1677 = vmatpush1.msra.mxu0 0.0
  %1678 = vmatprep.subr.mxu0 0.0
  %1679 = vmatpush1.msra.mxu0 0.0
  %1680 = vmatprep.subr.mxu0 0.0
  %1681 = vmatpush1.msra.mxu0 0.0
  %1682 = vmatprep.subr.mxu0 0.0
  %1683 = vmatpush1.msra.mxu0 0.0
  %1684 = vmatprep.subr.mxu0 0.0
  %1685 = vmatpush1.msra.mxu0 0.0
  %1686 = vmatprep.subr.mxu0 0.0
  %1687 = vmatpush1.msra.mxu0 0.0
  %1688 = vmatprep.subr.mxu0 0.0
  %1689 = vmatpush1.msra.mxu0 0.0
  %1690 = vmatprep.mubr.f32.mxu0 0.0
  %1691 = vmatmul.mubr.f32.gmra.mrb[0].mxu0 %v1623
  %v1692 = vpop.f32.mrb[0].mxu0
  %v1693 = vadd.f32 0.0, %v1692
  %v1694 = vpop.f32.mrb[0].mxu0
  %1695 = vdwg.mxu0
  %v1696 = vadd.f32 %v1625, %v1693
  %v1697 = vtanh.pop %v1696
  %vm1698 = vcmp.eq.s32.totalorder %v115, 7
  %v1699 = vsel %vm1698, %v113, 0.0
  %v1700 = vsel %vm120, %v1699, 0.0
  %1701 = vadd.xlane.f32.xlu0 %v1700
  %v1702 = vpop.xlane.xlu0 %1701
  %v1703 = vmul.f32 %v1702, %v128
  %v1704 = vmul.f32 %v1702, %v132
  %1705 = vmatprep.subr.mxu0 %v66
  %1706 = vmatpush1.msra.mxu0 %v65
  %1707 = vmatprep.subr.mxu0 %v68
  %1708 = vmatpush1.msra.mxu0 %v67
  %1709 = vmatprep.subr.mxu0 %v70
  %1710 = vmatpush1.msra.mxu0 %v69
  %1711 = vmatprep.subr.mxu0 %v72
  %1712 = vmatpush1.msra.mxu0 %v71
  %1713 = vmatprep.subr.mxu0 %v74
  %1714 = vmatpush1.msra.mxu0 %v73
  %1715 = vmatprep.subr.mxu0 %v76
  %1716 = vmatpush1.msra.mxu0 %v75
  %1717 = vmatprep.subr.mxu0 %v78
  %1718 = vmatpush1.msra.mxu0 %v77
  %1719 = vmatprep.subr.mxu0 %v80
  %1720 = vmatpush1.msra.mxu0 %v79
  %1721 = vmatprep.subr.mxu0 %v82
  %1722 = vmatpush1.msra.mxu0 %v81
  %1723 = vmatprep.subr.mxu0 %v84
  %1724 = vmatpush1.msra.mxu0 %v83
  %1725 = vmatprep.subr.mxu0 %v86
  %1726 = vmatpush1.msra.mxu0 %v85
  %1727 = vmatprep.subr.mxu0 %v88
  %1728 = vmatpush1.msra.mxu0 %v87
  %1729 = vmatprep.subr.mxu0 %v90
  %1730 = vmatpush1.msra.mxu0 %v89
  %1731 = vmatprep.subr.mxu0 %v92
  %1732 = vmatpush1.msra.mxu0 %v91
  %1733 = vmatprep.subr.mxu0 %v94
  %1734 = vmatpush1.msra.mxu0 %v93
  %1735 = vmatprep.subr.mxu0 %v96
  %1736 = vmatpush1.msra.mxu0 %v95
  %1737 = vmatprep.subr.mxu0 0.0
  %1738 = vmatpush1.msra.mxu0 0.0
  %1739 = vmatprep.subr.mxu0 0.0
  %1740 = vmatpush1.msra.mxu0 0.0
  %1741 = vmatprep.subr.mxu0 0.0
  %1742 = vmatpush1.msra.mxu0 0.0
  %1743 = vmatprep.subr.mxu0 0.0
  %1744 = vmatpush1.msra.mxu0 0.0
  %1745 = vmatprep.subr.mxu0 0.0
  %1746 = vmatpush1.msra.mxu0 0.0
  %1747 = vmatprep.subr.mxu0 0.0
  %1748 = vmatpush1.msra.mxu0 0.0
  %1749 = vmatprep.subr.mxu0 0.0
  %1750 = vmatpush1.msra.mxu0 0.0
  %1751 = vmatprep.subr.mxu0 0.0
  %1752 = vmatpush1.msra.mxu0 0.0
  %1753 = vmatprep.subr.mxu0 0.0
  %1754 = vmatpush1.msra.mxu0 0.0
  %1755 = vmatprep.subr.mxu0 0.0
  %1756 = vmatpush1.msra.mxu0 0.0
  %1757 = vmatprep.subr.mxu0 0.0
  %1758 = vmatpush1.msra.mxu0 0.0
  %1759 = vmatprep.subr.mxu0 0.0
  %1760 = vmatpush1.msra.mxu0 0.0
  %1761 = vmatprep.subr.mxu0 0.0
  %1762 = vmatpush1.msra.mxu0 0.0
  %1763 = vmatprep.subr.mxu0 0.0
  %1764 = vmatpush1.msra.mxu0 0.0
  %1765 = vmatprep.subr.mxu0 0.0
  %1766 = vmatpush1.msra.mxu0 0.0
  %1767 = vmatprep.subr.mxu0 0.0
  %1768 = vmatpush1.msra.mxu0 0.0
  %1769 = vmatprep.mubr.f32.mxu0 0.0
  %1770 = vmatmul.mubr.f32.gmra.mrb[0].mxu0 %v1624
  %v1771 = vpop.f32.mrb[0].mxu0
  %v1772 = vadd.f32 0.0, %v1771
  %v1773 = vpop.f32.mrb[0].mxu0
  %v1774 = vadd.f32 0.0, %v1773
  %1775 = vdwg.mxu0
  %1776 = vmatprep.subr.mxu0 %v34
  %1777 = vmatpush1.msra.mxu0 %v33
  %1778 = vmatprep.subr.mxu0 %v36
  %1779 = vmatpush1.msra.mxu0 %v35
  %1780 = vmatprep.subr.mxu0 %v38
  %1781 = vmatpush1.msra.mxu0 %v37
  %1782 = vmatprep.subr.mxu0 %v40
  %1783 = vmatpush1.msra.mxu0 %v39
  %1784 = vmatprep.subr.mxu0 %v42
  %1785 = vmatpush1.msra.mxu0 %v41
  %1786 = vmatprep.subr.mxu0 %v44
  %1787 = vmatpush1.msra.mxu0 %v43
  %1788 = vmatprep.subr.mxu0 %v46
  %1789 = vmatpush1.msra.mxu0 %v45
  %1790 = vmatprep.subr.mxu0 %v48
  %1791 = vmatpush1.msra.mxu0 %v47
  %1792 = vmatprep.subr.mxu0 %v50
  %1793 = vmatpush1.msra.mxu0 %v49
  %1794 = vmatprep.subr.mxu0 %v52
  %1795 = vmatpush1.msra.mxu0 %v51
  %1796 = vmatprep.subr.mxu0 %v54
  %1797 = vmatpush1.msra.mxu0 %v53
  %1798 = vmatprep.subr.mxu0 %v56
  %1799 = vmatpush1.msra.mxu0 %v55
  %1800 = vmatprep.subr.mxu0 %v58
  %1801 = vmatpush1.msra.mxu0 %v57
  %1802 = vmatprep.subr.mxu0 %v60
  %1803 = vmatpush1.msra.mxu0 %v59
  %1804 = vmatprep.subr.mxu0 %v62
  %1805 = vmatpush1.msra.mxu0 %v61
  %1806 = vmatprep.subr.mxu0 %v64
  %1807 = vmatpush1.msra.mxu0 %v63
  %1808 = vmatprep.subr.mxu0 0.0
  %1809 = vmatpush1.msra.mxu0 0.0
  %1810 = vmatprep.subr.mxu0 0.0
  %1811 = vmatpush1.msra.mxu0 0.0
  %1812 = vmatprep.subr.mxu0 0.0
  %1813 = vmatpush1.msra.mxu0 0.0
  %1814 = vmatprep.subr.mxu0 0.0
  %1815 = vmatpush1.msra.mxu0 0.0
  %1816 = vmatprep.subr.mxu0 0.0
  %1817 = vmatpush1.msra.mxu0 0.0
  %1818 = vmatprep.subr.mxu0 0.0
  %1819 = vmatpush1.msra.mxu0 0.0
  %1820 = vmatprep.subr.mxu0 0.0
  %1821 = vmatpush1.msra.mxu0 0.0
  %1822 = vmatprep.subr.mxu0 0.0
  %1823 = vmatpush1.msra.mxu0 0.0
  %1824 = vmatprep.subr.mxu0 0.0
  %1825 = vmatpush1.msra.mxu0 0.0
  %1826 = vmatprep.subr.mxu0 0.0
  %1827 = vmatpush1.msra.mxu0 0.0
  %1828 = vmatprep.subr.mxu0 0.0
  %1829 = vmatpush1.msra.mxu0 0.0
  %1830 = vmatprep.subr.mxu0 0.0
  %1831 = vmatpush1.msra.mxu0 0.0
  %1832 = vmatprep.subr.mxu0 0.0
  %1833 = vmatpush1.msra.mxu0 0.0
  %1834 = vmatprep.subr.mxu0 0.0
  %1835 = vmatpush1.msra.mxu0 0.0
  %1836 = vmatprep.subr.mxu0 0.0
  %1837 = vmatpush1.msra.mxu0 0.0
  %1838 = vmatprep.subr.mxu0 0.0
  %1839 = vmatpush1.msra.mxu0 0.0
  %1840 = vmatprep.mubr.f32.mxu0 0.0
  %1841 = vmatmul.mubr.f32.gmra.mrb[0].mxu0 %v1697
  %v1842 = vpop.f32.mrb[0].mxu0
  %v1843 = vadd.f32 %v1772, %v1842
  %v1844 = vpop.f32.mrb[0].mxu0
  %v1845 = vadd.f32 %v1774, %v1844
  %1846 = vdwg.mxu0
  %v1847 = vadd.f32 %v1845, %v1704
  %v1848 = vadd.f32 %v1624, %v1847
  %v1849 = vadd.f32 %v1843, %v1703
  %1850 = vmatprep.subr.mxu0 0.0
  %1851 = vmatpush1.msra.mxu0 %v97
  %1852 = vmatprep.subr.mxu0 0.0
  %1853 = vmatpush1.msra.mxu0 %v98
  %1854 = vmatprep.subr.mxu0 0.0
  %1855 = vmatpush1.msra.mxu0 %v99
  %1856 = vmatprep.subr.mxu0 0.0
  %1857 = vmatpush1.msra.mxu0 %v100
  %1858 = vmatprep.subr.mxu0 0.0
  %1859 = vmatpush1.msra.mxu0 %v101
  %1860 = vmatprep.subr.mxu0 0.0
  %1861 = vmatpush1.msra.mxu0 %v102
  %1862 = vmatprep.subr.mxu0 0.0
  %1863 = vmatpush1.msra.mxu0 %v103
  %1864 = vmatprep.subr.mxu0 0.0
  %1865 = vmatpush1.msra.mxu0 %v104
  %1866 = vmatprep.subr.mxu0 0.0
  %1867 = vmatpush1.msra.mxu0 %v105
  %1868 = vmatprep.subr.mxu0 0.0
  %1869 = vmatpush1.msra.mxu0 %v106
  %1870 = vmatprep.subr.mxu0 0.0
  %1871 = vmatpush1.msra.mxu0 %v107
  %1872 = vmatprep.subr.mxu0 0.0
  %1873 = vmatpush1.msra.mxu0 %v108
  %1874 = vmatprep.subr.mxu0 0.0
  %1875 = vmatpush1.msra.mxu0 %v109
  %1876 = vmatprep.subr.mxu0 0.0
  %1877 = vmatpush1.msra.mxu0 %v110
  %1878 = vmatprep.subr.mxu0 0.0
  %1879 = vmatpush1.msra.mxu0 %v111
  %1880 = vmatprep.subr.mxu0 0.0
  %1881 = vmatpush1.msra.mxu0 %v112
  %1882 = vmatprep.subr.mxu0 0.0
  %1883 = vmatpush1.msra.mxu0 0.0
  %1884 = vmatprep.subr.mxu0 0.0
  %1885 = vmatpush1.msra.mxu0 0.0
  %1886 = vmatprep.subr.mxu0 0.0
  %1887 = vmatpush1.msra.mxu0 0.0
  %1888 = vmatprep.subr.mxu0 0.0
  %1889 = vmatpush1.msra.mxu0 0.0
  %1890 = vmatprep.subr.mxu0 0.0
  %1891 = vmatpush1.msra.mxu0 0.0
  %1892 = vmatprep.subr.mxu0 0.0
  %1893 = vmatpush1.msra.mxu0 0.0
  %1894 = vmatprep.subr.mxu0 0.0
  %1895 = vmatpush1.msra.mxu0 0.0
  %1896 = vmatprep.subr.mxu0 0.0
  %1897 = vmatpush1.msra.mxu0 0.0
  %1898 = vmatprep.subr.mxu0 0.0
  %1899 = vmatpush1.msra.mxu0 0.0
  %1900 = vmatprep.subr.mxu0 0.0
  %1901 = vmatpush1.msra.mxu0 0.0
  %1902 = vmatprep.subr.mxu0 0.0
  %1903 = vmatpush1.msra.mxu0 0.0
  %1904 = vmatprep.subr.mxu0 0.0
  %1905 = vmatpush1.msra.mxu0 0.0
  %1906 = vmatprep.subr.mxu0 0.0
  %1907 = vmatpush1.msra.mxu0 0.0
  %1908 = vmatprep.subr.mxu0 0.0
  %1909 = vmatpush1.msra.mxu0 0.0
  %1910 = vmatprep.subr.mxu0 0.0
  %1911 = vmatpush1.msra.mxu0 0.0
  %1912 = vmatprep.subr.mxu0 0.0
  %1913 = vmatpush1.msra.mxu0 0.0
  %1914 = vmatprep.mubr.f32.mxu0 0.0
  %1915 = vmatmul.mubr.f32.gmra.mrb[0].mxu0 %v1847
  %v1916 = vpop.f32.mrb[0].mxu0
  %v1917 = vadd.f32 0.0, %v1916
  %v1918 = vpop.f32.mrb[0].mxu0
  %1919 = vdwg.mxu0
  %v1920 = vadd.f32 %v1849, %v1917
  %v1921 = vtanh.pop %v1920
  %1922 = vst [vmem:[#allocation2] sm:$0xff] %v1921
  %1923 = vst [vmem:[#allocation3] sm:$0xff] %v1848
  // Predicated region
  $region34: #{lmu_forward.1} parent=0 // pred_check
    %p1924 = pneg %p26
  $region35: #{lmu_forward.1} parent=0 // pred_check_branch
    %1926 = sbr.rel (%p1924) target = $region37
  $region36: #{lmu_forward.1} parent=0 // pred_region
    %v1927 = vld [vmem:[%s5] sm:$0xff]
    %v1928 = vld [vmem:[%s5 + $0x8] sm:$0xff]
    %v1929 = vld [vmem:[%s5 + $0x10] sm:$0xff]
    %v1930 = vld [vmem:[%s5 + $0x18] sm:$0xff]
    %v1931 = vld [vmem:[%s5 + $0x20] sm:$0xff]
    %v1932 = vld [vmem:[%s5 + $0x28] sm:$0xff]
    %v1933 = vld [vmem:[%s5 + $0x30] sm:$0xff]
    %v1934 = vld [vmem:[%s5 + $0x38] sm:$0xff]
    %v1935 = vld [vmem:[%s5 + $0x40] sm:$0xff]
    %v1936 = vld [vmem:[%s5 + $0x48] sm:$0xff]
    %v1937 = vld [vmem:[%s5 + $0x50] sm:$0xff]
    %v1938 = vld [vmem:[%s5 + $0x58] sm:$0xff]
    %v1939 = vld [vmem:[%s5 + $0x60] sm:$0xff]
    %v1940 = vld [vmem:[%s5 + $0x68] sm:$0xff]
    %v1941 = vld [vmem:[%s5 + $0x70] sm:$0xff]
    %v1942 = vld [vmem:[%s5 + $0x78] sm:$0xff]
    %v1943 = vld [vmem:[%s6] sm:$0x1]
    %v1945 = vlaneseq
    %v1946 = vshrl.u32 %v1945, 7
    %v1947 = vsub.s32 0, %v1946
    %v1948 = vrot.slane %v1943, %v1947
    %1950 = vmatprep.subr.mxu0 0.0
    %1951 = vmatpush1.msra.mxu0 %v1927
    %1952 = vmatprep.subr.mxu0 0.0
    %1953 = vmatpush1.msra.mxu0 %v1928
    %1954 = vmatprep.subr.mxu0 0.0
    %1955 = vmatpush1.msra.mxu0 %v1929
    %1956 = vmatprep.subr.mxu0 0.0
    %1957 = vmatpush1.msra.mxu0 %v1930
    %1958 = vmatprep.subr.mxu0 0.0
    %1959 = vmatpush1.msra.mxu0 %v1931
    %1960 = vmatprep.subr.mxu0 0.0
    %1961 = vmatpush1.msra.mxu0 %v1932
    %1962 = vmatprep.subr.mxu0 0.0
    %1963 = vmatpush1.msra.mxu0 %v1933
    %1964 = vmatprep.subr.mxu0 0.0
    %1965 = vmatpush1.msra.mxu0 %v1934
    %1966 = vmatprep.subr.mxu0 0.0
    %1967 = vmatpush1.msra.mxu0 %v1935
    %1968 = vmatprep.subr.mxu0 0.0
    %1969 = vmatpush1.msra.mxu0 %v1936
    %1970 = vmatprep.subr.mxu0 0.0
    %1971 = vmatpush1.msra.mxu0 %v1937
    %1972 = vmatprep.subr.mxu0 0.0
    %1973 = vmatpush1.msra.mxu0 %v1938
    %1974 = vmatprep.subr.mxu0 0.0
    %1975 = vmatpush1.msra.mxu0 %v1939
    %1976 = vmatprep.subr.mxu0 0.0
    %1977 = vmatpush1.msra.mxu0 %v1940
    %1978 = vmatprep.subr.mxu0 0.0
    %1979 = vmatpush1.msra.mxu0 %v1941
    %1980 = vmatprep.subr.mxu0 0.0
    %1981 = vmatpush1.msra.mxu0 %v1942
    %1982 = vmatprep.subr.mxu0 0.0
    %1983 = vmatpush1.msra.mxu0 0.0
    %1984 = vmatprep.subr.mxu0 0.0
    %1985 = vmatpush1.msra.mxu0 0.0
    %1986 = vmatprep.subr.mxu0 0.0
    %1987 = vmatpush1.msra.mxu0 0.0
    %1988 = vmatprep.subr.mxu0 0.0
    %1989 = vmatpush1.msra.mxu0 0.0
    %1990 = vmatprep.subr.mxu0 0.0
    %1991 = vmatpush1.msra.mxu0 0.0
    %1992 = vmatprep.subr.mxu0 0.0
    %1993 = vmatpush1.msra.mxu0 0.0
    %1994 = vmatprep.subr.mxu0 0.0
    %1995 = vmatpush1.msra.mxu0 0.0
    %1996 = vmatprep.subr.mxu0 0.0
    %1997 = vmatpush1.msra.mxu0 0.0
    %1998 = vmatprep.subr.mxu0 0.0
    %1999 = vmatpush1.msra.mxu0 0.0
    %2000 = vmatprep.subr.mxu0 0.0
    %2001 = vmatpush1.msra.mxu0 0.0
    %2002 = vmatprep.subr.mxu0 0.0
    %2003 = vmatpush1.msra.mxu0 0.0
    %2004 = vmatprep.subr.mxu0 0.0
    %2005 = vmatpush1.msra.mxu0 0.0
    %2006 = vmatprep.subr.mxu0 0.0
    %2007 = vmatpush1.msra.mxu0 0.0
    %2008 = vmatprep.subr.mxu0 0.0
    %2009 = vmatpush1.msra.mxu0 0.0
    %2010 = vmatprep.subr.mxu0 0.0
    %2011 = vmatpush1.msra.mxu0 0.0
    %2012 = vmatprep.subr.mxu0 0.0
    %2013 = vmatpush1.msra.mxu0 0.0
    %2014 = vmatprep.mubr.f32.mxu0 0.0
    %2015 = vmatmul.mubr.f32.gmra.mrb[0].mxu0 %v1921
    %v2016 = vpop.f32.mrb[0].mxu0
    %v2017 = vadd.f32 %v1948, %v2016
    %v2018 = vpop.f32.mrb[0].mxu0
    %2019 = vdwg.mxu0
    %vm2020 = vcmp.lt.s32.totalorder %v115, 10
    %v2021 = vsel %vm2020, %v2017, -1e+30
    %2022 = vmax.xlane.f32.xlu0 %v2021
    %v2023 = vpop.xlane.xlu0 %2022
    %v2024 = vsub.f32 %v2021, %v2023
    %v2025 = vmul.f32 %v2024, 1.442695
    %v2026 = vpow.pop %v2025
    %2027 = vadd.xlane.f32.xlu0 %v2026
    %v2028 = vpop.xlane.xlu0 %2027
    %v2029 = vrcp.pop %v2028
    %v2030 = vmul.f32 %v2026, %v2029
    %2031 = vst [vmem:[%s7] sm:$0xff] %v2030
  $region37: #{lmu_forward.1} parent=0 // pred_fallthru
    _
  // Predicated region
  $region38: #{lmu_forward.1} parent=0 // pred_check
    _
  $region39: #{lmu_forward.1} parent=0 // pred_check_branch
    %2033 = sbr.rel (0) target = $region41
  $region40: #{lmu_forward.1} parent=0 // pred_region
    _
  $region41: #{lmu_forward.1} parent=0 // pred_fallthru
    _
  // Predicated region
  $region42: #{lmu_forward.1} parent=0 // pred_check
    _
  $region43: #{lmu_forward.1} parent=0 // pred_check_branch
    %2035 = sbr.rel (0) target = $region45
  $region44: #{lmu_forward.1} parent=0 // pred_region
    _
  $region45: #{lmu_forward.1} parent=0 // pred_fallthru
    _

</llo_original>
